<compile_context>
chip_gen: v7x
topology: tpu7x:2x2x1
jax: 0.10.0
libtpu: 0.0.40
codegen_flags: <defaults>
</compile_context>

<pallas_src>
import functools

import jax
import jax.numpy as jnp
from jax.experimental import pallas as pl
from jax.experimental.pallas import tpu as pltpu

D_IN = 28 * 28          # 784
LAT_PAD = 128           # padded lane width for the 12- / 3-wide bottleneck layers

# true layer dims (in, out); weights stored pre-transposed so y = x @ W + b
ENC_DIMS = [(D_IN, 128), (128, 64), (64, 12), (12, 3)]
DEC_DIMS = [(3, 12), (12, 64), (64, 128), (128, D_IN)]

# padded (in, out) dims actually seen by the kernel (for the cost estimate)
PADDED_DIMS = [
    (D_IN, 128), (128, 64), (64, LAT_PAD), (LAT_PAD, LAT_PAD),
    (LAT_PAD, LAT_PAD), (LAT_PAD, 64), (64, 128), (128, D_IN),
]


def _round_up(x, m):
    return ((x + m - 1) // m) * m


def _cdiv(a, b):
    return -(-a // b)


def autoencoder_kernel(
    x_ref,
    w1, b1, w2, b2, w3, b3, w4, b4,
    w5, b5, w6, b6, w7, b7, w8, b8,
    enc_ref, dec_ref,
):
    """One batch tile of the fused AutoEncoder forward pass.

    x_ref:   (TILE_B, 784) f32
    enc_ref: (TILE_B, 3)   f32   (true latent)
    dec_ref: (TILE_B, 784) bf16  (reconstruction)
    """
    x = x_ref[...].astype(jnp.bfloat16)

    def lin(a, w_ref, b_ref):
        return jnp.dot(a.astype(jnp.bfloat16), w_ref[...],
                       preferred_element_type=jnp.float32) + b_ref[...]

    # ---- encoder: (Linear + Tanh) x3, final Linear -----------------------
    h = jnp.tanh(lin(x, w1, b1))
    h = jnp.tanh(lin(h, w2, b2))
    h = jnp.tanh(lin(h, w3, b3))          # 128-lane padded (cols >= 12 are 0)
    enc = lin(h, w4, b4)                  # 128-lane padded (cols >= 3 are 0)
    enc_ref[...] = enc[:, :3].astype(enc_ref.dtype)

    # ---- decoder: (Linear + Tanh) x3, final Linear + Sigmoid -------------
    d = jnp.tanh(lin(enc, w5, b5))        # padded enc cols hit zero rows of w5
    d = jnp.tanh(lin(d, w6, b6))
    d = jnp.tanh(lin(d, w7, b7))
    logits = lin(d, w8, b8)
    dec_ref[...] = jax.nn.sigmoid(logits).astype(dec_ref.dtype)


def init_params(key):
    """Deterministic PyTorch-style init: U(-1/sqrt(fan_in), 1/sqrt(fan_in))."""
    params = []
    for (fan_in, fan_out) in ENC_DIMS + DEC_DIMS:
        key, kw, kb = jax.random.split(key, 3)
        bound = 1.0 / jnp.sqrt(jnp.float32(fan_in))
        w = jax.random.uniform(kw, (fan_in, fan_out), jnp.float32, -bound, bound)
        b = jax.random.uniform(kb, (1, fan_out), jnp.float32, -bound, bound)
        params.append((w, b))
    return params


def _pad_to(a, shape):
    return jnp.pad(a, [(0, t - s) for s, t in zip(a.shape, shape)])


def prepare_params(params):
    """Call ONCE outside the jitted forward.

    Zero-pads the bottleneck layers to 128 lanes, casts all weights to bf16
    (f32 accumulation happens on the MXU), keeps biases in f32.
    """
    (w1, b1), (w2, b2), (w3, b3), (w4, b4), \
        (w5, b5), (w6, b6), (w7, b7), (w8, b8) = params

    def pw(w, shape=None):
        if shape is not None:
            w = _pad_to(w, shape)
        return w.astype(jnp.bfloat16)

    flat = [
        pw(w1), b1,
        pw(w2), b2,
        pw(w3, (64, LAT_PAD)), _pad_to(b3, (1, LAT_PAD)),
        pw(w4, (LAT_PAD, LAT_PAD)), _pad_to(b4, (1, LAT_PAD)),
        pw(w5, (LAT_PAD, LAT_PAD)), _pad_to(b5, (1, LAT_PAD)),
        pw(w6, (LAT_PAD, 64)), b6,
        pw(w7), b7,
        pw(w8), b8,
    ]
    return [jax.device_put(a) for a in flat]


@jax.jit
def autoencoder_forward(x, flat_params):
    """x: (B, 784) f32.  flat_params: output of prepare_params()."""
    B = x.shape[0]

    # Batch tile: multiple of 16 (bf16 sublane packing), aim for >=2 grid steps
    # (v7x has 2 TensorCores), cap at 1024 rows (~11 MiB double-buffered blocks,
    # well under 48 MiB VMEM limit on every generation).
    tile_b = max(16, min(1024, _round_up(_cdiv(B, 2), 16)))
    b_pad = _round_up(B, tile_b)
    if b_pad != B:
        x = jnp.pad(x, ((0, b_pad - B), (0, 0)))

    grid = (b_pad // tile_b,)

    def batch_spec(width):
        return pl.BlockSpec((tile_b, width), lambda i: (i, 0))

    def const_spec(a):  # whole array, same block every grid step -> resident in VMEM
        return pl.BlockSpec(a.shape, lambda i: (0, 0))

    flops = 2 * b_pad * sum(i * o for i, o in PADDED_DIMS)
    transcendentals = b_pad * (128 + 64 + LAT_PAD + LAT_PAD + 64 + 128 + 2 * D_IN)
    weight_bytes = sum(int(a.size) * a.dtype.itemsize for a in flat_params)
    bytes_accessed = (b_pad * D_IN * 4            # x read (f32)
                      + b_pad * D_IN * 2          # dec write (bf16)
                      + b_pad * 3 * 4             # enc write (f32)
                      + weight_bytes)

    enc, dec = pl.pallas_call(
        autoencoder_kernel,
        grid=grid,
        out_shape=(
            jax.ShapeDtypeStruct((b_pad, 3), jnp.float32),
            jax.ShapeDtypeStruct((b_pad, D_IN), jnp.bfloat16),
        ),
        in_specs=[batch_spec(D_IN)] + [const_spec(a) for a in flat_params],
        out_specs=(batch_spec(3), batch_spec(D_IN)),
        compiler_params=pltpu.CompilerParams(
            dimension_semantics=("parallel",),
            vmem_limit_bytes=48 << 20,   # under v7x's 64 MiB physical VMEM
        ),
        cost_estimate=pl.CostEstimate(
            flops=flops,
            transcendentals=transcendentals,
            bytes_accessed=bytes_accessed,
        ),
    )(x, *flat_params)

    if b_pad != B:
        enc = enc[:B]
        dec = dec[:B]
    return enc, dec


def reference_forward(x, params):
    """Pure-JAX reference with the same bf16-weight / f32-accumulate precision."""
    def lin(a, w, b):
        return jnp.dot(a.astype(jnp.bfloat16), w.astype(jnp.bfloat16),
                       preferred_element_type=jnp.float32) + b

    (w1, b1), (w2, b2), (w3, b3), (w4, b4), \
        (w5, b5), (w6, b6), (w7, b7), (w8, b8) = params
    h = jnp.tanh(lin(x, w1, b1))
    h = jnp.tanh(lin(h, w2, b2))
    h = jnp.tanh(lin(h, w3, b3))
    enc = lin(h, w4, b4)
    d = jnp.tanh(lin(enc, w5, b5))
    d = jnp.tanh(lin(d, w6, b6))
    d = jnp.tanh(lin(d, w7, b7))
    dec = jax.nn.sigmoid(lin(d, w8, b8))
    return enc, dec


if __name__ == "__main__":
    key = jax.random.PRNGKey(0)
    key, kx = jax.random.split(key)
    B = 8
    x = jax.random.normal(kx, (B, D_IN), jnp.float32)

    params = init_params(key)
    flat_params = prepare_params(params)   # pad/cast weights exactly once

    enc, dec = autoencoder_forward(x, flat_params)
    jax.block_until_ready((enc, dec))

    enc_ref, dec_ref = reference_forward(x, params)
    assert enc.shape == (B, 3) and dec.shape == (B, D_IN)
    assert jnp.allclose(enc, enc_ref, atol=1e-2, rtol=1e-2)
    assert jnp.allclose(dec.astype(jnp.float32), dec_ref, atol=1e-2, rtol=1e-2)

    print("KERNEL_OK")
</pallas_src>

<mosaic_0001>
module attributes {stable_mosaic.version = 11 : i64} {
  func.func @autoencoder_kernel(%arg0: i32, %arg1: memref<16x784xf32, #tpu.memory_space<vmem>>, %arg2: memref<784x128xbf16, #tpu.memory_space<vmem>>, %arg3: memref<1x128xf32, #tpu.memory_space<vmem>>, %arg4: memref<128x64xbf16, #tpu.memory_space<vmem>>, %arg5: memref<1x64xf32, #tpu.memory_space<vmem>>, %arg6: memref<64x128xbf16, #tpu.memory_space<vmem>>, %arg7: memref<1x128xf32, #tpu.memory_space<vmem>>, %arg8: memref<128x128xbf16, #tpu.memory_space<vmem>>, %arg9: memref<1x128xf32, #tpu.memory_space<vmem>>, %arg10: memref<128x128xbf16, #tpu.memory_space<vmem>>, %arg11: memref<1x128xf32, #tpu.memory_space<vmem>>, %arg12: memref<128x64xbf16, #tpu.memory_space<vmem>>, %arg13: memref<1x64xf32, #tpu.memory_space<vmem>>, %arg14: memref<64x128xbf16, #tpu.memory_space<vmem>>, %arg15: memref<1x128xf32, #tpu.memory_space<vmem>>, %arg16: memref<128x784xbf16, #tpu.memory_space<vmem>>, %arg17: memref<1x784xf32, #tpu.memory_space<vmem>>, %arg18: memref<16x3xf32, #tpu.memory_space<vmem>>, %arg19: memref<16x784xbf16, #tpu.memory_space<vmem>>) attributes {dimension_semantics = [#tpu.dimension_semantics<parallel>], iteration_bounds = array<i64: 1>, scalar_prefetch = 0 : i64, scratch_operands = 0 : i64, tpu.core_type = #tpu.core_type<tc>, window_params = [{transform_indices = @transform_0, window_bounds = array<i64: 16, 784>}, {pipeline_mode = #tpu.pipeline_mode<synchronous>, transform_indices = @transform_1, window_bounds = array<i64: 784, 128>}, {pipeline_mode = #tpu.pipeline_mode<synchronous>, transform_indices = @transform_2, window_bounds = array<i64: 1, 128>}, {pipeline_mode = #tpu.pipeline_mode<synchronous>, transform_indices = @transform_3, window_bounds = array<i64: 128, 64>}, {pipeline_mode = #tpu.pipeline_mode<synchronous>, transform_indices = @transform_4, window_bounds = array<i64: 1, 64>}, {pipeline_mode = #tpu.pipeline_mode<synchronous>, transform_indices = @transform_5, window_bounds = array<i64: 64, 128>}, {pipeline_mode = #tpu.pipeline_mode<synchronous>, transform_indices = @transform_6, window_bounds = array<i64: 1, 128>}, {pipeline_mode = #tpu.pipeline_mode<synchronous>, transform_indices = @transform_7, window_bounds = array<i64: 128, 128>}, {pipeline_mode = #tpu.pipeline_mode<synchronous>, transform_indices = @transform_8, window_bounds = array<i64: 1, 128>}, {pipeline_mode = #tpu.pipeline_mode<synchronous>, transform_indices = @transform_9, window_bounds = array<i64: 128, 128>}, {pipeline_mode = #tpu.pipeline_mode<synchronous>, transform_indices = @transform_10, window_bounds = array<i64: 1, 128>}, {pipeline_mode = #tpu.pipeline_mode<synchronous>, transform_indices = @transform_11, window_bounds = array<i64: 128, 64>}, {pipeline_mode = #tpu.pipeline_mode<synchronous>, transform_indices = @transform_12, window_bounds = array<i64: 1, 64>}, {pipeline_mode = #tpu.pipeline_mode<synchronous>, transform_indices = @transform_13, window_bounds = array<i64: 64, 128>}, {pipeline_mode = #tpu.pipeline_mode<synchronous>, transform_indices = @transform_14, window_bounds = array<i64: 1, 128>}, {pipeline_mode = #tpu.pipeline_mode<synchronous>, transform_indices = @transform_15, window_bounds = array<i64: 128, 784>}, {pipeline_mode = #tpu.pipeline_mode<synchronous>, transform_indices = @transform_16, window_bounds = array<i64: 1, 784>}, {transform_indices = @transform_17, window_bounds = array<i64: 16, 3>}, {transform_indices = @transform_18, window_bounds = array<i64: 16, 784>}]} {
    %c0 = arith.constant 0 : index
    %c0_0 = arith.constant 0 : index
    %0 = vector.load %arg1[%c0, %c0_0] : memref<16x784xf32, #tpu.memory_space<vmem>>, vector<16x784xf32>
    %1 = arith.truncf %0 : vector<16x784xf32> to vector<16x784xbf16>
    %c0_1 = arith.constant 0 : index
    %c0_2 = arith.constant 0 : index
    %2 = vector.load %arg2[%c0_1, %c0_2] : memref<784x128xbf16, #tpu.memory_space<vmem>>, vector<784x128xbf16>
    %cst = arith.constant dense<0.000000e+00> : vector<16x128xf32>
    %3 = tpu.matmul %1, %2, %cst {dimension_numbers = #tpu.dot_dimension_numbers<[1], [0], [0], [1], [0, 0, 1, 1], [], []>} : vector<16x784xbf16>, vector<784x128xbf16>, vector<16x128xf32> -> vector<16x128xf32>
    %c0_3 = arith.constant 0 : index
    %c0_4 = arith.constant 0 : index
    %4 = vector.load %arg3[%c0_3, %c0_4] : memref<1x128xf32, #tpu.memory_space<vmem>>, vector<1x128xf32>
    %5 = vector.broadcast %4 : vector<1x128xf32> to vector<16x128xf32>
    %6 = arith.addf %3, %5 : vector<16x128xf32>
    %7 = math.tanh %6 : vector<16x128xf32>
    %8 = arith.truncf %7 : vector<16x128xf32> to vector<16x128xbf16>
    %c0_5 = arith.constant 0 : index
    %c0_6 = arith.constant 0 : index
    %9 = vector.load %arg4[%c0_5, %c0_6] : memref<128x64xbf16, #tpu.memory_space<vmem>>, vector<128x64xbf16>
    %cst_7 = arith.constant dense<0.000000e+00> : vector<16x64xf32>
    %10 = tpu.matmul %8, %9, %cst_7 {dimension_numbers = #tpu.dot_dimension_numbers<[1], [0], [0], [1], [0, 0, 1, 1], [], []>} : vector<16x128xbf16>, vector<128x64xbf16>, vector<16x64xf32> -> vector<16x64xf32>
    %c0_8 = arith.constant 0 : index
    %c0_9 = arith.constant 0 : index
    %11 = vector.load %arg5[%c0_8, %c0_9] : memref<1x64xf32, #tpu.memory_space<vmem>>, vector<1x64xf32>
    %12 = vector.broadcast %11 : vector<1x64xf32> to vector<16x64xf32>
    %13 = arith.addf %10, %12 : vector<16x64xf32>
    %14 = math.tanh %13 : vector<16x64xf32>
    %15 = arith.truncf %14 : vector<16x64xf32> to vector<16x64xbf16>
    %c0_10 = arith.constant 0 : index
    %c0_11 = arith.constant 0 : index
    %16 = vector.load %arg6[%c0_10, %c0_11] : memref<64x128xbf16, #tpu.memory_space<vmem>>, vector<64x128xbf16>
    %cst_12 = arith.constant dense<0.000000e+00> : vector<16x128xf32>
    %17 = tpu.matmul %15, %16, %cst_12 {dimension_numbers = #tpu.dot_dimension_numbers<[1], [0], [0], [1], [0, 0, 1, 1], [], []>} : vector<16x64xbf16>, vector<64x128xbf16>, vector<16x128xf32> -> vector<16x128xf32>
    %c0_13 = arith.constant 0 : index
    %c0_14 = arith.constant 0 : index
    %18 = vector.load %arg7[%c0_13, %c0_14] : memref<1x128xf32, #tpu.memory_space<vmem>>, vector<1x128xf32>
    %19 = vector.broadcast %18 : vector<1x128xf32> to vector<16x128xf32>
    %20 = arith.addf %17, %19 : vector<16x128xf32>
    %21 = math.tanh %20 : vector<16x128xf32>
    %22 = arith.truncf %21 : vector<16x128xf32> to vector<16x128xbf16>
    %c0_15 = arith.constant 0 : index
    %c0_16 = arith.constant 0 : index
    %23 = vector.load %arg8[%c0_15, %c0_16] : memref<128x128xbf16, #tpu.memory_space<vmem>>, vector<128x128xbf16>
    %cst_17 = arith.constant dense<0.000000e+00> : vector<16x128xf32>
    %24 = tpu.matmul %22, %23, %cst_17 {dimension_numbers = #tpu.dot_dimension_numbers<[1], [0], [0], [1], [0, 0, 1, 1], [], []>} : vector<16x128xbf16>, vector<128x128xbf16>, vector<16x128xf32> -> vector<16x128xf32>
    %c0_18 = arith.constant 0 : index
    %c0_19 = arith.constant 0 : index
    %25 = vector.load %arg9[%c0_18, %c0_19] : memref<1x128xf32, #tpu.memory_space<vmem>>, vector<1x128xf32>
    %26 = vector.broadcast %25 : vector<1x128xf32> to vector<16x128xf32>
    %27 = arith.addf %24, %26 : vector<16x128xf32>
    %28 = vector.extract_strided_slice %27 {offsets = [0, 0], sizes = [16, 3], strides = [1, 1]} : vector<16x128xf32> to vector<16x3xf32>
    %c0_20 = arith.constant 0 : index
    %c0_21 = arith.constant 0 : index
    %29 = vector.load %arg18[%c0_20, %c0_21] : memref<16x3xf32, #tpu.memory_space<vmem>>, vector<16x3xf32>
    tpu.vector_store %arg18[%c0_20, %c0_21], %28 {strides = array<i32>} : memref<16x3xf32, #tpu.memory_space<vmem>>, vector<16x3xf32>,
    %30 = arith.truncf %27 : vector<16x128xf32> to vector<16x128xbf16>
    %c0_22 = arith.constant 0 : index
    %c0_23 = arith.constant 0 : index
    %31 = vector.load %arg10[%c0_22, %c0_23] : memref<128x128xbf16, #tpu.memory_space<vmem>>, vector<128x128xbf16>
    %cst_24 = arith.constant dense<0.000000e+00> : vector<16x128xf32>
    %32 = tpu.matmul %30, %31, %cst_24 {dimension_numbers = #tpu.dot_dimension_numbers<[1], [0], [0], [1], [0, 0, 1, 1], [], []>} : vector<16x128xbf16>, vector<128x128xbf16>, vector<16x128xf32> -> vector<16x128xf32>
    %c0_25 = arith.constant 0 : index
    %c0_26 = arith.constant 0 : index
    %33 = vector.load %arg11[%c0_25, %c0_26] : memref<1x128xf32, #tpu.memory_space<vmem>>, vector<1x128xf32>
    %34 = vector.broadcast %33 : vector<1x128xf32> to vector<16x128xf32>
    %35 = arith.addf %32, %34 : vector<16x128xf32>
    %36 = math.tanh %35 : vector<16x128xf32>
    %37 = arith.truncf %36 : vector<16x128xf32> to vector<16x128xbf16>
    %c0_27 = arith.constant 0 : index
    %c0_28 = arith.constant 0 : index
    %38 = vector.load %arg12[%c0_27, %c0_28] : memref<128x64xbf16, #tpu.memory_space<vmem>>, vector<128x64xbf16>
    %cst_29 = arith.constant dense<0.000000e+00> : vector<16x64xf32>
    %39 = tpu.matmul %37, %38, %cst_29 {dimension_numbers = #tpu.dot_dimension_numbers<[1], [0], [0], [1], [0, 0, 1, 1], [], []>} : vector<16x128xbf16>, vector<128x64xbf16>, vector<16x64xf32> -> vector<16x64xf32>
    %c0_30 = arith.constant 0 : index
    %c0_31 = arith.constant 0 : index
    %40 = vector.load %arg13[%c0_30, %c0_31] : memref<1x64xf32, #tpu.memory_space<vmem>>, vector<1x64xf32>
    %41 = vector.broadcast %40 : vector<1x64xf32> to vector<16x64xf32>
    %42 = arith.addf %39, %41 : vector<16x64xf32>
    %43 = math.tanh %42 : vector<16x64xf32>
    %44 = arith.truncf %43 : vector<16x64xf32> to vector<16x64xbf16>
    %c0_32 = arith.constant 0 : index
    %c0_33 = arith.constant 0 : index
    %45 = vector.load %arg14[%c0_32, %c0_33] : memref<64x128xbf16, #tpu.memory_space<vmem>>, vector<64x128xbf16>
    %cst_34 = arith.constant dense<0.000000e+00> : vector<16x128xf32>
    %46 = tpu.matmul %44, %45, %cst_34 {dimension_numbers = #tpu.dot_dimension_numbers<[1], [0], [0], [1], [0, 0, 1, 1], [], []>} : vector<16x64xbf16>, vector<64x128xbf16>, vector<16x128xf32> -> vector<16x128xf32>
    %c0_35 = arith.constant 0 : index
    %c0_36 = arith.constant 0 : index
    %47 = vector.load %arg15[%c0_35, %c0_36] : memref<1x128xf32, #tpu.memory_space<vmem>>, vector<1x128xf32>
    %48 = vector.broadcast %47 : vector<1x128xf32> to vector<16x128xf32>
    %49 = arith.addf %46, %48 : vector<16x128xf32>
    %50 = math.tanh %49 : vector<16x128xf32>
    %51 = arith.truncf %50 : vector<16x128xf32> to vector<16x128xbf16>
    %c0_37 = arith.constant 0 : index
    %c0_38 = arith.constant 0 : index
    %52 = vector.load %arg16[%c0_37, %c0_38] : memref<128x784xbf16, #tpu.memory_space<vmem>>, vector<128x784xbf16>
    %cst_39 = arith.constant dense<0.000000e+00> : vector<16x784xf32>
    %53 = tpu.matmul %51, %52, %cst_39 {dimension_numbers = #tpu.dot_dimension_numbers<[1], [0], [0], [1], [0, 0, 1, 1], [], []>} : vector<16x128xbf16>, vector<128x784xbf16>, vector<16x784xf32> -> vector<16x784xf32>
    %c0_40 = arith.constant 0 : index
    %c0_41 = arith.constant 0 : index
    %54 = vector.load %arg17[%c0_40, %c0_41] : memref<1x784xf32, #tpu.memory_space<vmem>>, vector<1x784xf32>
    %55 = vector.broadcast %54 : vector<1x784xf32> to vector<16x784xf32>
    %56 = arith.addf %53, %55 : vector<16x784xf32>
    %57 = arith.negf %56 : vector<16x784xf32>
    %58 = math.exp %57 : vector<16x784xf32>
    %cst_42 = arith.constant 1.000000e+00 : f32
    %59 = vector.broadcast %cst_42 : f32 to vector<16x784xf32>
    %60 = arith.addf %59, %58 : vector<16x784xf32>
    %61 = arith.divf %59, %60 : vector<16x784xf32>
    %62 = arith.truncf %61 : vector<16x784xf32> to vector<16x784xbf16>
    %c0_43 = arith.constant 0 : index
    %c0_44 = arith.constant 0 : index
    %63 = vector.load %arg19[%c0_43, %c0_44] : memref<16x784xbf16, #tpu.memory_space<vmem>>, vector<16x784xbf16>
    tpu.vector_store %arg19[%c0_43, %c0_44], %62 {strides = array<i32>} : memref<16x784xbf16, #tpu.memory_space<vmem>>, vector<16x784xbf16>,
    return
  }
  func.func @transform_0(%arg0: i32) -> (i32, i32) {
    %c0_i32 = arith.constant 0 : i32
    %c0_i32_0 = arith.constant 0 : i32
    return %arg0, %c0_i32 : i32, i32
  }
  func.func @transform_1(%arg0: i32) -> (i32, i32) {
    %c0_i32 = arith.constant 0 : i32
    %c0_i32_0 = arith.constant 0 : i32
    %c0_i32_1 = arith.constant 0 : i32
    return %c0_i32, %c0_i32_0 : i32, i32
  }
  func.func @transform_2(%arg0: i32) -> (i32, i32) {
    %c0_i32 = arith.constant 0 : i32
    %c0_i32_0 = arith.constant 0 : i32
    %c0_i32_1 = arith.constant 0 : i32
    return %c0_i32, %c0_i32_0 : i32, i32
  }
  func.func @transform_3(%arg0: i32) -> (i32, i32) {
    %c0_i32 = arith.constant 0 : i32
    %c0_i32_0 = arith.constant 0 : i32
    %c0_i32_1 = arith.constant 0 : i32
    return %c0_i32, %c0_i32_0 : i32, i32
  }
  func.func @transform_4(%arg0: i32) -> (i32, i32) {
    %c0_i32 = arith.constant 0 : i32
    %c0_i32_0 = arith.constant 0 : i32
    %c0_i32_1 = arith.constant 0 : i32
    return %c0_i32, %c0_i32_0 : i32, i32
  }
  func.func @transform_5(%arg0: i32) -> (i32, i32) {
    %c0_i32 = arith.constant 0 : i32
    %c0_i32_0 = arith.constant 0 : i32
    %c0_i32_1 = arith.constant 0 : i32
    return %c0_i32, %c0_i32_0 : i32, i32
  }
  func.func @transform_6(%arg0: i32) -> (i32, i32) {
    %c0_i32 = arith.constant 0 : i32
    %c0_i32_0 = arith.constant 0 : i32
    %c0_i32_1 = arith.constant 0 : i32
    return %c0_i32, %c0_i32_0 : i32, i32
  }
  func.func @transform_7(%arg0: i32) -> (i32, i32) {
    %c0_i32 = arith.constant 0 : i32
    %c0_i32_0 = arith.constant 0 : i32
    %c0_i32_1 = arith.constant 0 : i32
    return %c0_i32, %c0_i32_0 : i32, i32
  }
  func.func @transform_8(%arg0: i32) -> (i32, i32) {
    %c0_i32 = arith.constant 0 : i32
    %c0_i32_0 = arith.constant 0 : i32
    %c0_i32_1 = arith.constant 0 : i32
    return %c0_i32, %c0_i32_0 : i32, i32
  }
  func.func @transform_9(%arg0: i32) -> (i32, i32) {
    %c0_i32 = arith.constant 0 : i32
    %c0_i32_0 = arith.constant 0 : i32
    %c0_i32_1 = arith.constant 0 : i32
    return %c0_i32, %c0_i32_0 : i32, i32
  }
  func.func @transform_10(%arg0: i32) -> (i32, i32) {
    %c0_i32 = arith.constant 0 : i32
    %c0_i32_0 = arith.constant 0 : i32
    %c0_i32_1 = arith.constant 0 : i32
    return %c0_i32, %c0_i32_0 : i32, i32
  }
  func.func @transform_11(%arg0: i32) -> (i32, i32) {
    %c0_i32 = arith.constant 0 : i32
    %c0_i32_0 = arith.constant 0 : i32
    %c0_i32_1 = arith.constant 0 : i32
    return %c0_i32, %c0_i32_0 : i32, i32
  }
  func.func @transform_12(%arg0: i32) -> (i32, i32) {
    %c0_i32 = arith.constant 0 : i32
    %c0_i32_0 = arith.constant 0 : i32
    %c0_i32_1 = arith.constant 0 : i32
    return %c0_i32, %c0_i32_0 : i32, i32
  }
  func.func @transform_13(%arg0: i32) -> (i32, i32) {
    %c0_i32 = arith.constant 0 : i32
    %c0_i32_0 = arith.constant 0 : i32
    %c0_i32_1 = arith.constant 0 : i32
    return %c0_i32, %c0_i32_0 : i32, i32
  }
  func.func @transform_14(%arg0: i32) -> (i32, i32) {
    %c0_i32 = arith.constant 0 : i32
    %c0_i32_0 = arith.constant 0 : i32
    %c0_i32_1 = arith.constant 0 : i32
    return %c0_i32, %c0_i32_0 : i32, i32
  }
  func.func @transform_15(%arg0: i32) -> (i32, i32) {
    %c0_i32 = arith.constant 0 : i32
    %c0_i32_0 = arith.constant 0 : i32
    %c0_i32_1 = arith.constant 0 : i32
    return %c0_i32, %c0_i32_0 : i32, i32
  }
  func.func @transform_16(%arg0: i32) -> (i32, i32) {
    %c0_i32 = arith.constant 0 : i32
    %c0_i32_0 = arith.constant 0 : i32
    %c0_i32_1 = arith.constant 0 : i32
    return %c0_i32, %c0_i32_0 : i32, i32
  }
  func.func @transform_17(%arg0: i32) -> (i32, i32) {
    %c0_i32 = arith.constant 0 : i32
    %c0_i32_0 = arith.constant 0 : i32
    return %arg0, %c0_i32 : i32, i32
  }
  func.func @transform_18(%arg0: i32) -> (i32, i32) {
    %c0_i32 = arith.constant 0 : i32
    %c0_i32_0 = arith.constant 0 : i32
    return %arg0, %c0_i32 : i32, i32
  }
}

</mosaic_0001>

<llo_original>
// kernel: autoencoder_forward.1
$region0: #{autoencoder_forward.1}
  #allocation0 [shape = 'u32[]', space=smem, size = 0x4, offset = 0x4, fixed_abs, tag = 'smem constant byte address 0x4 - core index']
  #allocation1 [shape = 'u32[144,128]{1,0:T(1,128)}', space=vmem, size = 0x12000, scoped, tag = 'internal scratch']
  %s0 = inlined_call_operand.vmem [shape: f32[16,784], index: 0, kind: input, shape index: {}]
  %s1 = inlined_call_operand.vmem [shape: bf16[784,128], index: 1, kind: input, shape index: {}]
  %s2 = inlined_call_operand.vmem [shape: f32[1,128], index: 2, kind: input, shape index: {}]
  %s3 = inlined_call_operand.vmem [shape: bf16[128,64], index: 3, kind: input, shape index: {}]
  %s4 = inlined_call_operand.vmem [shape: f32[1,64], index: 4, kind: input, shape index: {}]
  %s5 = inlined_call_operand.vmem [shape: bf16[64,128], index: 5, kind: input, shape index: {}]
  %s6 = inlined_call_operand.vmem [shape: f32[1,128], index: 6, kind: input, shape index: {}]
  %s7 = inlined_call_operand.vmem [shape: bf16[128,128], index: 7, kind: input, shape index: {}]
  %s8 = inlined_call_operand.vmem [shape: f32[1,128], index: 8, kind: input, shape index: {}]
  %s9 = inlined_call_operand.vmem [shape: bf16[128,128], index: 9, kind: input, shape index: {}]
  %s10 = inlined_call_operand.vmem [shape: f32[1,128], index: 10, kind: input, shape index: {}]
  %s11 = inlined_call_operand.vmem [shape: bf16[128,64], index: 11, kind: input, shape index: {}]
  %s12 = inlined_call_operand.vmem [shape: f32[1,64], index: 12, kind: input, shape index: {}]
  %s13 = inlined_call_operand.vmem [shape: bf16[64,128], index: 13, kind: input, shape index: {}]
  %s14 = inlined_call_operand.vmem [shape: f32[1,128], index: 14, kind: input, shape index: {}]
  %s15 = inlined_call_operand.vmem [shape: bf16[128,784], index: 15, kind: input, shape index: {}]
  %s16 = inlined_call_operand.vmem [shape: f32[1,784], index: 16, kind: input, shape index: {}]
  %s17 = inlined_call_operand.vmem [shape: f32[16,3], index: 17, kind: output, shape index: {0}]
  %s18 = inlined_call_operand.vmem [shape: bf16[16,784], index: 18, kind: output, shape index: {1}]
  %19 = xla_tuple %s17, %s18
  %s20 = sld [smem:[#allocation0]]
  $region86: #{autoencoder_forward.1} parent=0
    _
  %s22 = ssub.s32 1, %s20
  %s23 = scalar_select 0, %s22, %s20
  // Predicated region
  $region2: #{autoencoder_forward.1} parent=0 // pred_check
    _
  $region3: #{autoencoder_forward.1} parent=0 // pred_check_branch
    %25 = sbr.rel (0) target = $region5
  $region4: #{autoencoder_forward.1} parent=0 // pred_region
    _
  $region5: #{autoencoder_forward.1} parent=0 // pred_fallthru
    _
  // Predicated region
  $region6: #{autoencoder_forward.1} parent=0 // pred_check
    _
  $region7: #{autoencoder_forward.1} parent=0 // pred_check_branch
    %27 = sbr.rel (0) target = $region9
  $region8: #{autoencoder_forward.1} parent=0 // pred_region
    _
  $region9: #{autoencoder_forward.1} parent=0 // pred_fallthru
    _
  // Predicated region
  $region10: #{autoencoder_forward.1} parent=0 // pred_check
    _
  $region11: #{autoencoder_forward.1} parent=0 // pred_check_branch
    %29 = sbr.rel (0) target = $region13
  $region12: #{autoencoder_forward.1} parent=0 // pred_region
    _
  $region13: #{autoencoder_forward.1} parent=0 // pred_fallthru
    _
  // Predicated region
  $region14: #{autoencoder_forward.1} parent=0 // pred_check
    _
  $region15: #{autoencoder_forward.1} parent=0 // pred_check_branch
    %31 = sbr.rel (0) target = $region17
  $region16: #{autoencoder_forward.1} parent=0 // pred_region
    _
  $region17: #{autoencoder_forward.1} parent=0 // pred_fallthru
    _
  // Predicated region
  $region18: #{autoencoder_forward.1} parent=0 // pred_check
    _
  $region19: #{autoencoder_forward.1} parent=0 // pred_check_branch
    %33 = sbr.rel (0) target = $region21
  $region20: #{autoencoder_forward.1} parent=0 // pred_region
    _
  $region21: #{autoencoder_forward.1} parent=0 // pred_fallthru
    _
  // Predicated region
  $region22: #{autoencoder_forward.1} parent=0 // pred_check
    _
  $region23: #{autoencoder_forward.1} parent=0 // pred_check_branch
    %35 = sbr.rel (0) target = $region25
  $region24: #{autoencoder_forward.1} parent=0 // pred_region
    _
  $region25: #{autoencoder_forward.1} parent=0 // pred_fallthru
    _
  // Predicated region
  $region26: #{autoencoder_forward.1} parent=0 // pred_check
    _
  $region27: #{autoencoder_forward.1} parent=0 // pred_check_branch
    %37 = sbr.rel (0) target = $region29
  $region28: #{autoencoder_forward.1} parent=0 // pred_region
    _
  $region29: #{autoencoder_forward.1} parent=0 // pred_fallthru
    _
  // Predicated region
  $region30: #{autoencoder_forward.1} parent=0 // pred_check
    _
  $region31: #{autoencoder_forward.1} parent=0 // pred_check_branch
    %39 = sbr.rel (0) target = $region33
  $region32: #{autoencoder_forward.1} parent=0 // pred_region
    _
  $region33: #{autoencoder_forward.1} parent=0 // pred_fallthru
    _
  // Predicated region
  $region34: #{autoencoder_forward.1} parent=0 // pred_check
    _
  $region35: #{autoencoder_forward.1} parent=0 // pred_check_branch
    %41 = sbr.rel (0) target = $region37
  $region36: #{autoencoder_forward.1} parent=0 // pred_region
    _
  $region37: #{autoencoder_forward.1} parent=0 // pred_fallthru
    _
  // Predicated region
  $region38: #{autoencoder_forward.1} parent=0 // pred_check
    _
  $region39: #{autoencoder_forward.1} parent=0 // pred_check_branch
    %43 = sbr.rel (0) target = $region41
  $region40: #{autoencoder_forward.1} parent=0 // pred_region
    _
  $region41: #{autoencoder_forward.1} parent=0 // pred_fallthru
    _
  // Predicated region
  $region42: #{autoencoder_forward.1} parent=0 // pred_check
    _
  $region43: #{autoencoder_forward.1} parent=0 // pred_check_branch
    %45 = sbr.rel (0) target = $region45
  $region44: #{autoencoder_forward.1} parent=0 // pred_region
    _
  $region45: #{autoencoder_forward.1} parent=0 // pred_fallthru
    _
  // Predicated region
  $region46: #{autoencoder_forward.1} parent=0 // pred_check
    _
  $region47: #{autoencoder_forward.1} parent=0 // pred_check_branch
    %47 = sbr.rel (0) target = $region49
  $region48: #{autoencoder_forward.1} parent=0 // pred_region
    _
  $region49: #{autoencoder_forward.1} parent=0 // pred_fallthru
    _
  // Predicated region
  $region50: #{autoencoder_forward.1} parent=0 // pred_check
    _
  $region51: #{autoencoder_forward.1} parent=0 // pred_check_branch
    %49 = sbr.rel (0) target = $region53
  $region52: #{autoencoder_forward.1} parent=0 // pred_region
    _
  $region53: #{autoencoder_forward.1} parent=0 // pred_fallthru
    _
  // Predicated region
  $region54: #{autoencoder_forward.1} parent=0 // pred_check
    _
  $region55: #{autoencoder_forward.1} parent=0 // pred_check_branch
    %51 = sbr.rel (0) target = $region57
  $region56: #{autoencoder_forward.1} parent=0 // pred_region
    _
  $region57: #{autoencoder_forward.1} parent=0 // pred_fallthru
    _
  // Predicated region
  $region58: #{autoencoder_forward.1} parent=0 // pred_check
    _
  $region59: #{autoencoder_forward.1} parent=0 // pred_check_branch
    %53 = sbr.rel (0) target = $region61
  $region60: #{autoencoder_forward.1} parent=0 // pred_region
    _
  $region61: #{autoencoder_forward.1} parent=0 // pred_fallthru
    _
  // Predicated region
  $region62: #{autoencoder_forward.1} parent=0 // pred_check
    _
  $region63: #{autoencoder_forward.1} parent=0 // pred_check_branch
    %55 = sbr.rel (0) target = $region65
  $region64: #{autoencoder_forward.1} parent=0 // pred_region
    _
  $region65: #{autoencoder_forward.1} parent=0 // pred_fallthru
    _
  // Predicated region
  $region66: #{autoencoder_forward.1} parent=0 // pred_check
    _
  $region67: #{autoencoder_forward.1} parent=0 // pred_check_branch
    %57 = sbr.rel (0) target = $region69
  $region68: #{autoencoder_forward.1} parent=0 // pred_region
    _
  $region69: #{autoencoder_forward.1} parent=0 // pred_fallthru
    _
  %v59 = vld [vmem:[%s0] sm:$0xff]
  %v60 = vld [vmem:[%s0 + $0x8] sm:$0xff]
  %v61 = vld [vmem:[%s0 + $0x10] sm:$0xff]
  %v62 = vld [vmem:[%s0 + $0x18] sm:$0xff]
  %v63 = vld [vmem:[%s0 + $0x20] sm:$0xff]
  %v64 = vld [vmem:[%s0 + $0x28] sm:$0xff]
  %v65 = vld [vmem:[%s0 + $0x30] sm:$0xff]
  %v66 = vld [vmem:[%s0 + $0x38] sm:$0xff]
  %v67 = vld [vmem:[%s0 + $0x40] sm:$0xff]
  %v68 = vld [vmem:[%s0 + $0x48] sm:$0xff]
  %v69 = vld [vmem:[%s0 + $0x50] sm:$0xff]
  %v70 = vld [vmem:[%s0 + $0x58] sm:$0xff]
  %v71 = vld [vmem:[%s0 + $0x60] sm:$0xff]
  %v72 = vld [vmem:[%s0 + $0x68] sm:$0xff]
  %v73 = vpack.c.bf16 %v66, %v59
  %v74 = vpack.c.bf16 %v67, %v60
  %v75 = vpack.c.bf16 %v68, %v61
  %v76 = vpack.c.bf16 %v69, %v62
  %v77 = vpack.c.bf16 %v70, %v63
  %v78 = vpack.c.bf16 %v71, %v64
  %v79 = vpack.c.bf16 %v72, %v65
  %v80 = vld [vmem:[%s1] sm:$0xf]
  %v81 = vld [vmem:[%s1 + $0x4] sm:$0xf]
  %v82 = vld [vmem:[%s1 + $0x8] sm:$0xf]
  %v83 = vld [vmem:[%s1 + $0xc] sm:$0xf]
  %v84 = vld [vmem:[%s1 + $0x10] sm:$0xf]
  %v85 = vld [vmem:[%s1 + $0x14] sm:$0xf]
  %v86 = vld [vmem:[%s1 + $0x18] sm:$0xf]
  %v87 = vld [vmem:[%s1 + $0x1c] sm:$0xf]
  %v88 = vld [vmem:[%s1 + $0x20] sm:$0xf]
  %v89 = vld [vmem:[%s1 + $0x24] sm:$0xf]
  %v90 = vld [vmem:[%s1 + $0x28] sm:$0xf]
  %v91 = vld [vmem:[%s1 + $0x2c] sm:$0xf]
  %v92 = vld [vmem:[%s1 + $0x30] sm:$0xf]
  %v93 = vld [vmem:[%s1 + $0x34] sm:$0xf]
  %v94 = vld [vmem:[%s1 + $0x38] sm:$0xf]
  %v95 = vld [vmem:[%s1 + $0x3c] sm:$0xf]
  %v96 = vld [vmem:[%s1 + $0x40] sm:$0xf]
  %v97 = vld [vmem:[%s1 + $0x44] sm:$0xf]
  %v98 = vld [vmem:[%s1 + $0x48] sm:$0xf]
  %v99 = vld [vmem:[%s1 + $0x4c] sm:$0xf]
  %v100 = vld [vmem:[%s1 + $0x50] sm:$0xf]
  %v101 = vld [vmem:[%s1 + $0x54] sm:$0xf]
  %v102 = vld [vmem:[%s1 + $0x58] sm:$0xf]
  %v103 = vld [vmem:[%s1 + $0x5c] sm:$0xf]
  %v104 = vld [vmem:[%s1 + $0x60] sm:$0xf]
  %v105 = vld [vmem:[%s1 + $0x64] sm:$0xf]
  %v106 = vld [vmem:[%s1 + $0x68] sm:$0xf]
  %v107 = vld [vmem:[%s1 + $0x6c] sm:$0xf]
  %v108 = vld [vmem:[%s1 + $0x70] sm:$0xf]
  %v109 = vld [vmem:[%s1 + $0x74] sm:$0xf]
  %v110 = vld [vmem:[%s1 + $0x78] sm:$0xf]
  %v111 = vld [vmem:[%s1 + $0x7c] sm:$0xf]
  %v112 = vld [vmem:[%s1 + $0x80] sm:$0xf]
  %v113 = vld [vmem:[%s1 + $0x84] sm:$0xf]
  %v114 = vld [vmem:[%s1 + $0x88] sm:$0xf]
  %v115 = vld [vmem:[%s1 + $0x8c] sm:$0xf]
  %v116 = vld [vmem:[%s1 + $0x90] sm:$0xf]
  %v117 = vld [vmem:[%s1 + $0x94] sm:$0xf]
  %v118 = vld [vmem:[%s1 + $0x98] sm:$0xf]
  %v119 = vld [vmem:[%s1 + $0x9c] sm:$0xf]
  %v120 = vld [vmem:[%s1 + $0xa0] sm:$0xf]
  %v121 = vld [vmem:[%s1 + $0xa4] sm:$0xf]
  %v122 = vld [vmem:[%s1 + $0xa8] sm:$0xf]
  %v123 = vld [vmem:[%s1 + $0xac] sm:$0xf]
  %v124 = vld [vmem:[%s1 + $0xb0] sm:$0xf]
  %v125 = vld [vmem:[%s1 + $0xb4] sm:$0xf]
  %v126 = vld [vmem:[%s1 + $0xb8] sm:$0xf]
  %v127 = vld [vmem:[%s1 + $0xbc] sm:$0xf]
  %v128 = vld [vmem:[%s1 + $0xc0] sm:$0xf]
  %v129 = vld [vmem:[%s1 + $0xc4] sm:$0xf]
  %v130 = vld [vmem:[%s1 + $0xc8] sm:$0xf]
  %v131 = vld [vmem:[%s1 + $0xcc] sm:$0xf]
  %v132 = vld [vmem:[%s1 + $0xd0] sm:$0xf]
  %v133 = vld [vmem:[%s1 + $0xd4] sm:$0xf]
  %v134 = vld [vmem:[%s1 + $0xd8] sm:$0xf]
  %v135 = vld [vmem:[%s1 + $0xdc] sm:$0xf]
  %v136 = vld [vmem:[%s1 + $0xe0] sm:$0xf]
  %v137 = vld [vmem:[%s1 + $0xe4] sm:$0xf]
  %v138 = vld [vmem:[%s1 + $0xe8] sm:$0xf]
  %v139 = vld [vmem:[%s1 + $0xec] sm:$0xf]
  %v140 = vld [vmem:[%s1 + $0xf0] sm:$0xf]
  %v141 = vld [vmem:[%s1 + $0xf4] sm:$0xf]
  %v142 = vld [vmem:[%s1 + $0xf8] sm:$0xf]
  %v143 = vld [vmem:[%s1 + $0xfc] sm:$0xf]
  %v144 = vld [vmem:[%s1 + $0x100] sm:$0xf]
  %v145 = vld [vmem:[%s1 + $0x104] sm:$0xf]
  %v146 = vld [vmem:[%s1 + $0x108] sm:$0xf]
  %v147 = vld [vmem:[%s1 + $0x10c] sm:$0xf]
  %v148 = vld [vmem:[%s1 + $0x110] sm:$0xf]
  %v149 = vld [vmem:[%s1 + $0x114] sm:$0xf]
  %v150 = vld [vmem:[%s1 + $0x118] sm:$0xf]
  %v151 = vld [vmem:[%s1 + $0x11c] sm:$0xf]
  %v152 = vld [vmem:[%s1 + $0x120] sm:$0xf]
  %v153 = vld [vmem:[%s1 + $0x124] sm:$0xf]
  %v154 = vld [vmem:[%s1 + $0x128] sm:$0xf]
  %v155 = vld [vmem:[%s1 + $0x12c] sm:$0xf]
  %v156 = vld [vmem:[%s1 + $0x130] sm:$0xf]
  %v157 = vld [vmem:[%s1 + $0x134] sm:$0xf]
  %v158 = vld [vmem:[%s1 + $0x138] sm:$0xf]
  %v159 = vld [vmem:[%s1 + $0x13c] sm:$0xf]
  %v160 = vld [vmem:[%s1 + $0x140] sm:$0xf]
  %v161 = vld [vmem:[%s1 + $0x144] sm:$0xf]
  %v162 = vld [vmem:[%s1 + $0x148] sm:$0xf]
  %v163 = vld [vmem:[%s1 + $0x14c] sm:$0xf]
  %v164 = vld [vmem:[%s1 + $0x150] sm:$0xf]
  %v165 = vld [vmem:[%s1 + $0x154] sm:$0xf]
  %v166 = vld [vmem:[%s1 + $0x158] sm:$0xf]
  %v167 = vld [vmem:[%s1 + $0x15c] sm:$0xf]
  %v168 = vld [vmem:[%s1 + $0x160] sm:$0xf]
  %v169 = vld [vmem:[%s1 + $0x164] sm:$0xf]
  %v170 = vld [vmem:[%s1 + $0x168] sm:$0xf]
  %v171 = vld [vmem:[%s1 + $0x16c] sm:$0xf]
  %v172 = vld [vmem:[%s1 + $0x170] sm:$0xf]
  %v173 = vld [vmem:[%s1 + $0x174] sm:$0xf]
  %v174 = vld [vmem:[%s1 + $0x178] sm:$0xf]
  %v175 = vld [vmem:[%s1 + $0x17c] sm:$0xf]
  %v176 = vld [vmem:[%s1 + $0x180] sm:$0xf]
  %v177 = vld [vmem:[%s1 + $0x184] sm:$0xf]
  %v178 = vld [vmem:[%s2] sm:$0x1]
  %v180 = vlaneseq
  %v181 = vshrl.u32 %v180, 7
  %v182 = vsub.s32 0, %v181
  %v183 = vrot.slane %v178, %v182
  %v283 = vunpack.c.l.b16 %v80
  %v284 = vunpack.c.l.b16 %v81
  %v285 = vunpack.c.l.b16 %v82
  %v286 = vunpack.c.l.b16 %v83
  %v287 = vunpack.c.l.b16 %v84
  %v288 = vunpack.c.l.b16 %v85
  %v289 = vunpack.c.l.b16 %v86
  %v290 = vunpack.c.l.b16 %v87
  %v291 = vunpack.c.l.b16 %v88
  %v292 = vunpack.c.l.b16 %v89
  %v293 = vunpack.c.l.b16 %v90
  %v294 = vunpack.c.l.b16 %v91
  %v295 = vunpack.c.l.b16 %v92
  %v296 = vunpack.c.l.b16 %v93
  %v297 = vunpack.c.l.b16 %v94
  %v298 = vunpack.c.l.b16 %v95
  %v299 = vunpack.c.l.b16 %v96
  %v300 = vunpack.c.l.b16 %v97
  %v301 = vunpack.c.l.b16 %v98
  %v302 = vunpack.c.l.b16 %v99
  %v303 = vunpack.c.l.b16 %v100
  %v304 = vunpack.c.l.b16 %v101
  %v305 = vunpack.c.l.b16 %v102
  %v306 = vunpack.c.l.b16 %v103
  %v307 = vunpack.c.l.b16 %v104
  %v308 = vunpack.c.l.b16 %v105
  %v309 = vunpack.c.l.b16 %v106
  %v310 = vunpack.c.l.b16 %v107
  %v311 = vunpack.c.l.b16 %v108
  %v312 = vunpack.c.l.b16 %v109
  %v313 = vunpack.c.l.b16 %v110
  %v314 = vunpack.c.l.b16 %v111
  %v315 = vunpack.c.l.b16 %v112
  %v316 = vunpack.c.l.b16 %v113
  %v317 = vunpack.c.l.b16 %v114
  %v318 = vunpack.c.l.b16 %v115
  %v319 = vunpack.c.l.b16 %v116
  %v320 = vunpack.c.l.b16 %v117
  %v321 = vunpack.c.l.b16 %v118
  %v322 = vunpack.c.l.b16 %v119
  %v323 = vunpack.c.l.b16 %v120
  %v324 = vunpack.c.l.b16 %v121
  %v325 = vunpack.c.l.b16 %v122
  %v326 = vunpack.c.l.b16 %v123
  %v327 = vunpack.c.l.b16 %v124
  %v328 = vunpack.c.l.b16 %v125
  %v329 = vunpack.c.l.b16 %v126
  %v330 = vunpack.c.l.b16 %v127
  %v331 = vunpack.c.l.b16 %v128
  %v332 = vunpack.c.l.b16 %v129
  %v333 = vunpack.c.l.b16 %v130
  %v334 = vunpack.c.l.b16 %v131
  %v335 = vunpack.c.l.b16 %v132
  %v336 = vunpack.c.l.b16 %v133
  %v337 = vunpack.c.l.b16 %v134
  %v338 = vunpack.c.l.b16 %v135
  %v339 = vunpack.c.l.b16 %v136
  %v340 = vunpack.c.l.b16 %v137
  %v341 = vunpack.c.l.b16 %v138
  %v342 = vunpack.c.l.b16 %v139
  %v343 = vunpack.c.l.b16 %v140
  %v344 = vunpack.c.l.b16 %v141
  %v345 = vunpack.c.l.b16 %v142
  %v346 = vunpack.c.l.b16 %v143
  %v347 = vunpack.c.l.b16 %v144
  %v348 = vunpack.c.l.b16 %v145
  %v349 = vunpack.c.l.b16 %v146
  %v350 = vunpack.c.l.b16 %v147
  %v351 = vunpack.c.l.b16 %v148
  %v352 = vunpack.c.l.b16 %v149
  %v353 = vunpack.c.l.b16 %v150
  %v354 = vunpack.c.l.b16 %v151
  %v355 = vunpack.c.l.b16 %v152
  %v356 = vunpack.c.l.b16 %v153
  %v357 = vunpack.c.l.b16 %v154
  %v358 = vunpack.c.l.b16 %v155
  %v359 = vunpack.c.l.b16 %v156
  %v360 = vunpack.c.l.b16 %v157
  %v361 = vunpack.c.l.b16 %v158
  %v362 = vunpack.c.l.b16 %v159
  %v363 = vunpack.c.l.b16 %v160
  %v364 = vunpack.c.l.b16 %v161
  %v365 = vunpack.c.l.b16 %v162
  %v366 = vunpack.c.l.b16 %v163
  %v367 = vunpack.c.l.b16 %v164
  %v368 = vunpack.c.l.b16 %v165
  %v369 = vunpack.c.l.b16 %v166
  %v370 = vunpack.c.l.b16 %v167
  %v371 = vunpack.c.l.b16 %v168
  %v372 = vunpack.c.l.b16 %v169
  %v373 = vunpack.c.l.b16 %v170
  %v374 = vunpack.c.l.b16 %v171
  %v375 = vunpack.c.l.b16 %v172
  %v376 = vunpack.c.l.b16 %v173
  %v377 = vunpack.c.l.b16 %v174
  %v378 = vunpack.c.l.b16 %v175
  %v379 = vunpack.c.l.b16 %v176
  %v380 = vunpack.c.l.b16 %v177
  %v381 = vpack.c.b16 %v284, %v283
  %v382 = vpack.c.b16 %v286, %v285
  %v383 = vpack.c.b16 %v288, %v287
  %v384 = vpack.c.b16 %v290, %v289
  %v385 = vpack.c.b16 %v292, %v291
  %v386 = vpack.c.b16 %v294, %v293
  %v387 = vpack.c.b16 %v296, %v295
  %v388 = vpack.c.b16 %v298, %v297
  %v389 = vpack.c.b16 %v300, %v299
  %v390 = vpack.c.b16 %v302, %v301
  %v391 = vpack.c.b16 %v304, %v303
  %v392 = vpack.c.b16 %v306, %v305
  %v393 = vpack.c.b16 %v308, %v307
  %v394 = vpack.c.b16 %v310, %v309
  %v395 = vpack.c.b16 %v312, %v311
  %v396 = vpack.c.b16 %v314, %v313
  %v397 = vpack.c.b16 %v316, %v315
  %v398 = vpack.c.b16 %v318, %v317
  %v399 = vpack.c.b16 %v320, %v319
  %v400 = vpack.c.b16 %v322, %v321
  %v401 = vpack.c.b16 %v324, %v323
  %v402 = vpack.c.b16 %v326, %v325
  %v403 = vpack.c.b16 %v328, %v327
  %v404 = vpack.c.b16 %v330, %v329
  %v405 = vpack.c.b16 %v332, %v331
  %v406 = vpack.c.b16 %v334, %v333
  %v407 = vpack.c.b16 %v336, %v335
  %v408 = vpack.c.b16 %v338, %v337
  %v409 = vpack.c.b16 %v340, %v339
  %v410 = vpack.c.b16 %v342, %v341
  %v411 = vpack.c.b16 %v344, %v343
  %v412 = vpack.c.b16 %v346, %v345
  %v413 = vpack.c.b16 %v348, %v347
  %v414 = vpack.c.b16 %v350, %v349
  %v415 = vpack.c.b16 %v352, %v351
  %v416 = vpack.c.b16 %v354, %v353
  %v417 = vpack.c.b16 %v356, %v355
  %v418 = vpack.c.b16 %v358, %v357
  %v419 = vpack.c.b16 %v360, %v359
  %v420 = vpack.c.b16 %v362, %v361
  %v421 = vpack.c.b16 %v364, %v363
  %v422 = vpack.c.b16 %v366, %v365
  %v423 = vpack.c.b16 %v368, %v367
  %v424 = vpack.c.b16 %v370, %v369
  %v425 = vpack.c.b16 %v372, %v371
  %v426 = vpack.c.b16 %v374, %v373
  %v427 = vpack.c.b16 %v376, %v375
  %v428 = vpack.c.b16 %v378, %v377
  %v429 = vpack.c.b16 %v380, %v379
  %vm479 = vcmask 130048
  %v481 = vsel %vm479, %v79, 0
  %483 = vmatprep.subr.bf16.mxu0 0
  %484 = vmatpush1.bf16.msra.mxu0 %v381
  %485 = vmatprep.subr.bf16.mxu0 0
  %486 = vmatpush1.bf16.msra.mxu0 %v382
  %487 = vmatprep.subr.bf16.mxu0 0
  %488 = vmatpush1.bf16.msra.mxu0 %v383
  %489 = vmatprep.subr.bf16.mxu0 0
  %490 = vmatpush1.bf16.msra.mxu0 %v384
  %491 = vmatprep.subr.bf16.mxu0 0
  %492 = vmatpush1.bf16.msra.mxu0 %v385
  %493 = vmatprep.subr.bf16.mxu0 0
  %494 = vmatpush1.bf16.msra.mxu0 %v386
  %495 = vmatprep.subr.bf16.mxu0 0
  %496 = vmatpush1.bf16.msra.mxu0 %v387
  %497 = vmatprep.subr.bf16.mxu0 0
  %498 = vmatpush1.bf16.msra.mxu0 %v388
  %499 = vmatprep.subr.bf16.mxu0 0
  %500 = vmatpush1.bf16.msra.mxu0 %v389
  %501 = vmatprep.subr.bf16.mxu0 0
  %502 = vmatpush1.bf16.msra.mxu0 %v390
  %503 = vmatprep.subr.bf16.mxu0 0
  %504 = vmatpush1.bf16.msra.mxu0 %v391
  %505 = vmatprep.subr.bf16.mxu0 0
  %506 = vmatpush1.bf16.msra.mxu0 %v392
  %507 = vmatprep.subr.bf16.mxu0 0
  %508 = vmatpush1.bf16.msra.mxu0 %v393
  %509 = vmatprep.subr.bf16.mxu0 0
  %510 = vmatpush1.bf16.msra.mxu0 %v394
  %511 = vmatprep.subr.bf16.mxu0 0
  %512 = vmatpush1.bf16.msra.mxu0 %v395
  %513 = vmatprep.subr.bf16.mxu0 0
  %514 = vmatpush1.bf16.msra.mxu0 %v396
  %515 = vmatprep.mubr.bf16.mxu0 %v74
  %516 = vmatmul.mubr.bf16.gmra.mrb[0].mxu0 %v73
  %v517 = vpop.f32.mrb[0].mxu0
  %v518 = vadd.f32 %v183, %v517
  %v519 = vpop.f32.mrb[0].mxu0
  %v520 = vpop.f32.mrb[0].mxu0
  %v521 = vadd.f32 %v183, %v520
  %v522 = vpop.f32.mrb[0].mxu0
  %523 = vdwg.mxu0
  %524 = vmatprep.subr.bf16.mxu0 0
  %525 = vmatpush1.bf16.msra.mxu0 %v397
  %526 = vmatprep.subr.bf16.mxu0 0
  %527 = vmatpush1.bf16.msra.mxu0 %v398
  %528 = vmatprep.subr.bf16.mxu0 0
  %529 = vmatpush1.bf16.msra.mxu0 %v399
  %530 = vmatprep.subr.bf16.mxu0 0
  %531 = vmatpush1.bf16.msra.mxu0 %v400
  %532 = vmatprep.subr.bf16.mxu0 0
  %533 = vmatpush1.bf16.msra.mxu0 %v401
  %534 = vmatprep.subr.bf16.mxu0 0
  %535 = vmatpush1.bf16.msra.mxu0 %v402
  %536 = vmatprep.subr.bf16.mxu0 0
  %537 = vmatpush1.bf16.msra.mxu0 %v403
  %538 = vmatprep.subr.bf16.mxu0 0
  %539 = vmatpush1.bf16.msra.mxu0 %v404
  %540 = vmatprep.subr.bf16.mxu0 0
  %541 = vmatpush1.bf16.msra.mxu0 %v405
  %542 = vmatprep.subr.bf16.mxu0 0
  %543 = vmatpush1.bf16.msra.mxu0 %v406
  %544 = vmatprep.subr.bf16.mxu0 0
  %545 = vmatpush1.bf16.msra.mxu0 %v407
  %546 = vmatprep.subr.bf16.mxu0 0
  %547 = vmatpush1.bf16.msra.mxu0 %v408
  %548 = vmatprep.subr.bf16.mxu0 0
  %549 = vmatpush1.bf16.msra.mxu0 %v409
  %550 = vmatprep.subr.bf16.mxu0 0
  %551 = vmatpush1.bf16.msra.mxu0 %v410
  %552 = vmatprep.subr.bf16.mxu0 0
  %553 = vmatpush1.bf16.msra.mxu0 %v411
  %554 = vmatprep.subr.bf16.mxu0 0
  %555 = vmatpush1.bf16.msra.mxu0 %v412
  %556 = vmatprep.mubr.bf16.mxu0 %v76
  %557 = vmatmul.mubr.bf16.gmra.mrb[0].mxu0 %v75
  %v558 = vpop.f32.mrb[0].mxu0
  %v559 = vadd.f32 %v518, %v558
  %v560 = vpop.f32.mrb[0].mxu0
  %v561 = vpop.f32.mrb[0].mxu0
  %v562 = vadd.f32 %v521, %v561
  %v563 = vpop.f32.mrb[0].mxu0
  %564 = vdwg.mxu0
  %565 = vmatprep.subr.bf16.mxu0 0
  %566 = vmatpush1.bf16.msra.mxu0 %v413
  %567 = vmatprep.subr.bf16.mxu0 0
  %568 = vmatpush1.bf16.msra.mxu0 %v414
  %569 = vmatprep.subr.bf16.mxu0 0
  %570 = vmatpush1.bf16.msra.mxu0 %v415
  %571 = vmatprep.subr.bf16.mxu0 0
  %572 = vmatpush1.bf16.msra.mxu0 %v416
  %573 = vmatprep.subr.bf16.mxu0 0
  %574 = vmatpush1.bf16.msra.mxu0 %v417
  %575 = vmatprep.subr.bf16.mxu0 0
  %576 = vmatpush1.bf16.msra.mxu0 %v418
  %577 = vmatprep.subr.bf16.mxu0 0
  %578 = vmatpush1.bf16.msra.mxu0 %v419
  %579 = vmatprep.subr.bf16.mxu0 0
  %580 = vmatpush1.bf16.msra.mxu0 %v420
  %581 = vmatprep.subr.bf16.mxu0 0
  %582 = vmatpush1.bf16.msra.mxu0 %v421
  %583 = vmatprep.subr.bf16.mxu0 0
  %584 = vmatpush1.bf16.msra.mxu0 %v422
  %585 = vmatprep.subr.bf16.mxu0 0
  %586 = vmatpush1.bf16.msra.mxu0 %v423
  %587 = vmatprep.subr.bf16.mxu0 0
  %588 = vmatpush1.bf16.msra.mxu0 %v424
  %589 = vmatprep.subr.bf16.mxu0 0
  %590 = vmatpush1.bf16.msra.mxu0 %v425
  %591 = vmatprep.subr.bf16.mxu0 0
  %592 = vmatpush1.bf16.msra.mxu0 %v426
  %593 = vmatprep.subr.bf16.mxu0 0
  %594 = vmatpush1.bf16.msra.mxu0 %v427
  %595 = vmatprep.subr.bf16.mxu0 0
  %596 = vmatpush1.bf16.msra.mxu0 %v428
  %597 = vmatprep.mubr.bf16.mxu0 %v78
  %598 = vmatmul.mubr.bf16.gmra.mrb[0].mxu0 %v77
  %v599 = vpop.f32.mrb[0].mxu0
  %v600 = vadd.f32 %v559, %v599
  %v601 = vpop.f32.mrb[0].mxu0
  %v602 = vpop.f32.mrb[0].mxu0
  %v603 = vadd.f32 %v562, %v602
  %v604 = vpop.f32.mrb[0].mxu0
  %605 = vdwg.mxu0
  %606 = vmatprep.subr.bf16.mxu0 0
  %607 = vmatpush1.bf16.msra.mxu0 %v429
  %608 = vmatprep.subr.bf16.mxu0 0
  %609 = vmatpush1.bf16.msra.mxu0 0
  %610 = vmatprep.subr.bf16.mxu0 0
  %611 = vmatpush1.bf16.msra.mxu0 0
  %612 = vmatprep.subr.bf16.mxu0 0
  %613 = vmatpush1.bf16.msra.mxu0 0
  %614 = vmatprep.subr.bf16.mxu0 0
  %615 = vmatpush1.bf16.msra.mxu0 0
  %616 = vmatprep.subr.bf16.mxu0 0
  %617 = vmatpush1.bf16.msra.mxu0 0
  %618 = vmatprep.subr.bf16.mxu0 0
  %619 = vmatpush1.bf16.msra.mxu0 0
  %620 = vmatprep.subr.bf16.mxu0 0
  %621 = vmatpush1.bf16.msra.mxu0 0
  %622 = vmatprep.subr.bf16.mxu0 0
  %623 = vmatpush1.bf16.msra.mxu0 0
  %624 = vmatprep.subr.bf16.mxu0 0
  %625 = vmatpush1.bf16.msra.mxu0 0
  %626 = vmatprep.subr.bf16.mxu0 0
  %627 = vmatpush1.bf16.msra.mxu0 0
  %628 = vmatprep.subr.bf16.mxu0 0
  %629 = vmatpush1.bf16.msra.mxu0 0
  %630 = vmatprep.subr.bf16.mxu0 0
  %631 = vmatpush1.bf16.msra.mxu0 0
  %632 = vmatprep.subr.bf16.mxu0 0
  %633 = vmatpush1.bf16.msra.mxu0 0
  %634 = vmatprep.subr.bf16.mxu0 0
  %635 = vmatpush1.bf16.msra.mxu0 0
  %636 = vmatprep.subr.bf16.mxu0 0
  %637 = vmatpush1.bf16.msra.mxu0 0
  %638 = vmatprep.mubr.bf16.mxu0 0
  %639 = vmatmul.mubr.bf16.gmra.mrb[0].mxu0 %v481
  %v640 = vpop.f32.mrb[0].mxu0
  %v641 = vadd.f32 %v600, %v640
  %v642 = vpop.f32.mrb[0].mxu0
  %v643 = vpop.f32.mrb[0].mxu0
  %v644 = vadd.f32 %v603, %v643
  %v645 = vpop.f32.mrb[0].mxu0
  %646 = vdwg.mxu0
  %v647 = vtanh.pop %v641
  %v648 = vtanh.pop %v644
  %v649 = vpack.c.bf16 %v648, %v647
  %v650 = vld [vmem:[%s3] sm:$0xf]
  %v651 = vld [vmem:[%s3 + $0x4] sm:$0xf]
  %v652 = vld [vmem:[%s3 + $0x8] sm:$0xf]
  %v653 = vld [vmem:[%s3 + $0xc] sm:$0xf]
  %v654 = vld [vmem:[%s3 + $0x10] sm:$0xf]
  %v655 = vld [vmem:[%s3 + $0x14] sm:$0xf]
  %v656 = vld [vmem:[%s3 + $0x18] sm:$0xf]
  %v657 = vld [vmem:[%s3 + $0x1c] sm:$0xf]
  %v658 = vld [vmem:[%s3 + $0x20] sm:$0xf]
  %v659 = vld [vmem:[%s3 + $0x24] sm:$0xf]
  %v660 = vld [vmem:[%s3 + $0x28] sm:$0xf]
  %v661 = vld [vmem:[%s3 + $0x2c] sm:$0xf]
  %v662 = vld [vmem:[%s3 + $0x30] sm:$0xf]
  %v663 = vld [vmem:[%s3 + $0x34] sm:$0xf]
  %v664 = vld [vmem:[%s3 + $0x38] sm:$0xf]
  %v665 = vld [vmem:[%s3 + $0x3c] sm:$0xf]
  %v666 = vld [vmem:[%s4] sm:$0x1]
  %v668 = vlaneseq
  %v669 = vshrl.u32 %v668, 7
  %v670 = vsub.s32 0, %v669
  %v671 = vrot.slane %v666, %v670
  %v689 = vunpack.c.l.b16 %v650
  %v690 = vunpack.c.l.b16 %v651
  %v691 = vunpack.c.l.b16 %v652
  %v692 = vunpack.c.l.b16 %v653
  %v693 = vunpack.c.l.b16 %v654
  %v694 = vunpack.c.l.b16 %v655
  %v695 = vunpack.c.l.b16 %v656
  %v696 = vunpack.c.l.b16 %v657
  %v697 = vunpack.c.l.b16 %v658
  %v698 = vunpack.c.l.b16 %v659
  %v699 = vunpack.c.l.b16 %v660
  %v700 = vunpack.c.l.b16 %v661
  %v701 = vunpack.c.l.b16 %v662
  %v702 = vunpack.c.l.b16 %v663
  %v703 = vunpack.c.l.b16 %v664
  %v704 = vunpack.c.l.b16 %v665
  %v705 = vpack.c.b16 %v690, %v689
  %v706 = vpack.c.b16 %v692, %v691
  %v707 = vpack.c.b16 %v694, %v693
  %v708 = vpack.c.b16 %v696, %v695
  %v709 = vpack.c.b16 %v698, %v697
  %v710 = vpack.c.b16 %v700, %v699
  %v711 = vpack.c.b16 %v702, %v701
  %v712 = vpack.c.b16 %v704, %v703
  %721 = vmatprep.subr.bf16.mxu0 0
  %722 = vmatpush1.bf16.msra.mxu0 %v705
  %723 = vmatprep.subr.bf16.mxu0 0
  %724 = vmatpush1.bf16.msra.mxu0 %v706
  %725 = vmatprep.subr.bf16.mxu0 0
  %726 = vmatpush1.bf16.msra.mxu0 %v707
  %727 = vmatprep.subr.bf16.mxu0 0
  %728 = vmatpush1.bf16.msra.mxu0 %v708
  %729 = vmatprep.subr.bf16.mxu0 0
  %730 = vmatpush1.bf16.msra.mxu0 %v709
  %731 = vmatprep.subr.bf16.mxu0 0
  %732 = vmatpush1.bf16.msra.mxu0 %v710
  %733 = vmatprep.subr.bf16.mxu0 0
  %734 = vmatpush1.bf16.msra.mxu0 %v711
  %735 = vmatprep.subr.bf16.mxu0 0
  %736 = vmatpush1.bf16.msra.mxu0 %v712
  %737 = vmatprep.subr.bf16.mxu0 0
  %738 = vmatpush1.bf16.msra.mxu0 0
  %739 = vmatprep.subr.bf16.mxu0 0
  %740 = vmatpush1.bf16.msra.mxu0 0
  %741 = vmatprep.subr.bf16.mxu0 0
  %742 = vmatpush1.bf16.msra.mxu0 0
  %743 = vmatprep.subr.bf16.mxu0 0
  %744 = vmatpush1.bf16.msra.mxu0 0
  %745 = vmatprep.subr.bf16.mxu0 0
  %746 = vmatpush1.bf16.msra.mxu0 0
  %747 = vmatprep.subr.bf16.mxu0 0
  %748 = vmatpush1.bf16.msra.mxu0 0
  %749 = vmatprep.subr.bf16.mxu0 0
  %750 = vmatpush1.bf16.msra.mxu0 0
  %751 = vmatprep.subr.bf16.mxu0 0
  %752 = vmatpush1.bf16.msra.mxu0 0
  %753 = vmatprep.mubr.bf16.mxu0 0
  %754 = vmatmul.mubr.bf16.gmra.mrb[0].mxu0 %v649
  %v755 = vpop.f32.mrb[0].mxu0
  %v756 = vadd.f32 %v671, %v755
  %v757 = vpop.f32.mrb[0].mxu0
  %v758 = vpop.f32.mrb[0].mxu0
  %v759 = vadd.f32 %v671, %v758
  %v760 = vpop.f32.mrb[0].mxu0
  %761 = vdwg.mxu0
  %v762 = vtanh.pop %v756
  %v763 = vtanh.pop %v759
  %v764 = vpack.c.bf16 %v763, %v762
  %v765 = vld [vmem:[%s5] sm:$0xf]
  %v766 = vld [vmem:[%s5 + $0x4] sm:$0xf]
  %v767 = vld [vmem:[%s5 + $0x8] sm:$0xf]
  %v768 = vld [vmem:[%s5 + $0xc] sm:$0xf]
  %v769 = vld [vmem:[%s5 + $0x10] sm:$0xf]
  %v770 = vld [vmem:[%s5 + $0x14] sm:$0xf]
  %v771 = vld [vmem:[%s5 + $0x18] sm:$0xf]
  %v772 = vld [vmem:[%s5 + $0x1c] sm:$0xf]
  %v773 = vld [vmem:[%s6] sm:$0x1]
  %v775 = vlaneseq
  %v776 = vshrl.u32 %v775, 7
  %v777 = vsub.s32 0, %v776
  %v778 = vrot.slane %v773, %v777
  %v788 = vunpack.c.l.b16 %v765
  %v789 = vunpack.c.l.b16 %v766
  %v790 = vunpack.c.l.b16 %v767
  %v791 = vunpack.c.l.b16 %v768
  %v792 = vunpack.c.l.b16 %v769
  %v793 = vunpack.c.l.b16 %v770
  %v794 = vunpack.c.l.b16 %v771
  %v795 = vunpack.c.l.b16 %v772
  %v796 = vpack.c.b16 %v789, %v788
  %v797 = vpack.c.b16 %v791, %v790
  %v798 = vpack.c.b16 %v793, %v792
  %v799 = vpack.c.b16 %v795, %v794
  %vm804 = vcmask 523264
  %v806 = vsel %vm804, %v764, 0
  %808 = vmatprep.subr.bf16.mxu0 0
  %809 = vmatpush1.bf16.msra.mxu0 %v796
  %810 = vmatprep.subr.bf16.mxu0 0
  %811 = vmatpush1.bf16.msra.mxu0 %v797
  %812 = vmatprep.subr.bf16.mxu0 0
  %813 = vmatpush1.bf16.msra.mxu0 %v798
  %814 = vmatprep.subr.bf16.mxu0 0
  %815 = vmatpush1.bf16.msra.mxu0 %v799
  %816 = vmatprep.subr.bf16.mxu0 0
  %817 = vmatpush1.bf16.msra.mxu0 0
  %818 = vmatprep.subr.bf16.mxu0 0
  %819 = vmatpush1.bf16.msra.mxu0 0
  %820 = vmatprep.subr.bf16.mxu0 0
  %821 = vmatpush1.bf16.msra.mxu0 0
  %822 = vmatprep.subr.bf16.mxu0 0
  %823 = vmatpush1.bf16.msra.mxu0 0
  %824 = vmatprep.subr.bf16.mxu0 0
  %825 = vmatpush1.bf16.msra.mxu0 0
  %826 = vmatprep.subr.bf16.mxu0 0
  %827 = vmatpush1.bf16.msra.mxu0 0
  %828 = vmatprep.subr.bf16.mxu0 0
  %829 = vmatpush1.bf16.msra.mxu0 0
  %830 = vmatprep.subr.bf16.mxu0 0
  %831 = vmatpush1.bf16.msra.mxu0 0
  %832 = vmatprep.subr.bf16.mxu0 0
  %833 = vmatpush1.bf16.msra.mxu0 0
  %834 = vmatprep.subr.bf16.mxu0 0
  %835 = vmatpush1.bf16.msra.mxu0 0
  %836 = vmatprep.subr.bf16.mxu0 0
  %837 = vmatpush1.bf16.msra.mxu0 0
  %838 = vmatprep.subr.bf16.mxu0 0
  %839 = vmatpush1.bf16.msra.mxu0 0
  %840 = vmatprep.mubr.bf16.mxu0 0
  %841 = vmatmul.mubr.bf16.gmra.mrb[0].mxu0 %v806
  %v842 = vpop.f32.mrb[0].mxu0
  %v843 = vadd.f32 %v778, %v842
  %v844 = vpop.f32.mrb[0].mxu0
  %v845 = vpop.f32.mrb[0].mxu0
  %v846 = vadd.f32 %v778, %v845
  %v847 = vpop.f32.mrb[0].mxu0
  %848 = vdwg.mxu0
  %v849 = vtanh.pop %v843
  %v850 = vtanh.pop %v846
  %v851 = vpack.c.bf16 %v850, %v849
  %v852 = vld [vmem:[%s7] sm:$0xf]
  %v853 = vld [vmem:[%s7 + $0x4] sm:$0xf]
  %v854 = vld [vmem:[%s7 + $0x8] sm:$0xf]
  %v855 = vld [vmem:[%s7 + $0xc] sm:$0xf]
  %v856 = vld [vmem:[%s7 + $0x10] sm:$0xf]
  %v857 = vld [vmem:[%s7 + $0x14] sm:$0xf]
  %v858 = vld [vmem:[%s7 + $0x18] sm:$0xf]
  %v859 = vld [vmem:[%s7 + $0x1c] sm:$0xf]
  %v860 = vld [vmem:[%s7 + $0x20] sm:$0xf]
  %v861 = vld [vmem:[%s7 + $0x24] sm:$0xf]
  %v862 = vld [vmem:[%s7 + $0x28] sm:$0xf]
  %v863 = vld [vmem:[%s7 + $0x2c] sm:$0xf]
  %v864 = vld [vmem:[%s7 + $0x30] sm:$0xf]
  %v865 = vld [vmem:[%s7 + $0x34] sm:$0xf]
  %v866 = vld [vmem:[%s7 + $0x38] sm:$0xf]
  %v867 = vld [vmem:[%s7 + $0x3c] sm:$0xf]
  %v868 = vld [vmem:[%s8] sm:$0x1]
  %v870 = vlaneseq
  %v871 = vshrl.u32 %v870, 7
  %v872 = vsub.s32 0, %v871
  %v873 = vrot.slane %v868, %v872
  %v891 = vunpack.c.l.b16 %v852
  %v892 = vunpack.c.l.b16 %v853
  %v893 = vunpack.c.l.b16 %v854
  %v894 = vunpack.c.l.b16 %v855
  %v895 = vunpack.c.l.b16 %v856
  %v896 = vunpack.c.l.b16 %v857
  %v897 = vunpack.c.l.b16 %v858
  %v898 = vunpack.c.l.b16 %v859
  %v899 = vunpack.c.l.b16 %v860
  %v900 = vunpack.c.l.b16 %v861
  %v901 = vunpack.c.l.b16 %v862
  %v902 = vunpack.c.l.b16 %v863
  %v903 = vunpack.c.l.b16 %v864
  %v904 = vunpack.c.l.b16 %v865
  %v905 = vunpack.c.l.b16 %v866
  %v906 = vunpack.c.l.b16 %v867
  %v907 = vpack.c.b16 %v892, %v891
  %v908 = vpack.c.b16 %v894, %v893
  %v909 = vpack.c.b16 %v896, %v895
  %v910 = vpack.c.b16 %v898, %v897
  %v911 = vpack.c.b16 %v900, %v899
  %v912 = vpack.c.b16 %v902, %v901
  %v913 = vpack.c.b16 %v904, %v903
  %v914 = vpack.c.b16 %v906, %v905
  %923 = vmatprep.subr.bf16.mxu0 0
  %924 = vmatpush1.bf16.msra.mxu0 %v907
  %925 = vmatprep.subr.bf16.mxu0 0
  %926 = vmatpush1.bf16.msra.mxu0 %v908
  %927 = vmatprep.subr.bf16.mxu0 0
  %928 = vmatpush1.bf16.msra.mxu0 %v909
  %929 = vmatprep.subr.bf16.mxu0 0
  %930 = vmatpush1.bf16.msra.mxu0 %v910
  %931 = vmatprep.subr.bf16.mxu0 0
  %932 = vmatpush1.bf16.msra.mxu0 %v911
  %933 = vmatprep.subr.bf16.mxu0 0
  %934 = vmatpush1.bf16.msra.mxu0 %v912
  %935 = vmatprep.subr.bf16.mxu0 0
  %936 = vmatpush1.bf16.msra.mxu0 %v913
  %937 = vmatprep.subr.bf16.mxu0 0
  %938 = vmatpush1.bf16.msra.mxu0 %v914
  %939 = vmatprep.subr.bf16.mxu0 0
  %940 = vmatpush1.bf16.msra.mxu0 0
  %941 = vmatprep.subr.bf16.mxu0 0
  %942 = vmatpush1.bf16.msra.mxu0 0
  %943 = vmatprep.subr.bf16.mxu0 0
  %944 = vmatpush1.bf16.msra.mxu0 0
  %945 = vmatprep.subr.bf16.mxu0 0
  %946 = vmatpush1.bf16.msra.mxu0 0
  %947 = vmatprep.subr.bf16.mxu0 0
  %948 = vmatpush1.bf16.msra.mxu0 0
  %949 = vmatprep.subr.bf16.mxu0 0
  %950 = vmatpush1.bf16.msra.mxu0 0
  %951 = vmatprep.subr.bf16.mxu0 0
  %952 = vmatpush1.bf16.msra.mxu0 0
  %953 = vmatprep.subr.bf16.mxu0 0
  %954 = vmatpush1.bf16.msra.mxu0 0
  %955 = vmatprep.mubr.bf16.mxu0 0
  %956 = vmatmul.mubr.bf16.gmra.mrb[0].mxu0 %v851
  %v957 = vpop.f32.mrb[0].mxu0
  %v958 = vadd.f32 %v873, %v957
  %v959 = vpop.f32.mrb[0].mxu0
  %v960 = vpop.f32.mrb[0].mxu0
  %v961 = vadd.f32 %v873, %v960
  %v962 = vpop.f32.mrb[0].mxu0
  %963 = vdwg.mxu0
  %vm964 = vcmask 23552
  %965 = vst.msk [vmem:[%s17] sm:$0xff] %vm964, %v958
  %966 = vst.msk [vmem:[%s17 + $0x8] sm:$0xff] %vm964, %v961
  %v967 = vpack.c.bf16 %v961, %v958
  %v968 = vld [vmem:[%s9] sm:$0xf]
  %v969 = vld [vmem:[%s9 + $0x4] sm:$0xf]
  %v970 = vld [vmem:[%s9 + $0x8] sm:$0xf]
  %v971 = vld [vmem:[%s9 + $0xc] sm:$0xf]
  %v972 = vld [vmem:[%s9 + $0x10] sm:$0xf]
  %v973 = vld [vmem:[%s9 + $0x14] sm:$0xf]
  %v974 = vld [vmem:[%s9 + $0x18] sm:$0xf]
  %v975 = vld [vmem:[%s9 + $0x1c] sm:$0xf]
  %v976 = vld [vmem:[%s9 + $0x20] sm:$0xf]
  %v977 = vld [vmem:[%s9 + $0x24] sm:$0xf]
  %v978 = vld [vmem:[%s9 + $0x28] sm:$0xf]
  %v979 = vld [vmem:[%s9 + $0x2c] sm:$0xf]
  %v980 = vld [vmem:[%s9 + $0x30] sm:$0xf]
  %v981 = vld [vmem:[%s9 + $0x34] sm:$0xf]
  %v982 = vld [vmem:[%s9 + $0x38] sm:$0xf]
  %v983 = vld [vmem:[%s9 + $0x3c] sm:$0xf]
  %v984 = vld [vmem:[%s10] sm:$0x1]
  %v986 = vlaneseq
  %v987 = vshrl.u32 %v986, 7
  %v988 = vsub.s32 0, %v987
  %v989 = vrot.slane %v984, %v988
  %v1007 = vunpack.c.l.b16 %v968
  %v1008 = vunpack.c.l.b16 %v969
  %v1009 = vunpack.c.l.b16 %v970
  %v1010 = vunpack.c.l.b16 %v971
  %v1011 = vunpack.c.l.b16 %v972
  %v1012 = vunpack.c.l.b16 %v973
  %v1013 = vunpack.c.l.b16 %v974
  %v1014 = vunpack.c.l.b16 %v975
  %v1015 = vunpack.c.l.b16 %v976
  %v1016 = vunpack.c.l.b16 %v977
  %v1017 = vunpack.c.l.b16 %v978
  %v1018 = vunpack.c.l.b16 %v979
  %v1019 = vunpack.c.l.b16 %v980
  %v1020 = vunpack.c.l.b16 %v981
  %v1021 = vunpack.c.l.b16 %v982
  %v1022 = vunpack.c.l.b16 %v983
  %v1023 = vpack.c.b16 %v1008, %v1007
  %v1024 = vpack.c.b16 %v1010, %v1009
  %v1025 = vpack.c.b16 %v1012, %v1011
  %v1026 = vpack.c.b16 %v1014, %v1013
  %v1027 = vpack.c.b16 %v1016, %v1015
  %v1028 = vpack.c.b16 %v1018, %v1017
  %v1029 = vpack.c.b16 %v1020, %v1019
  %v1030 = vpack.c.b16 %v1022, %v1021
  %1039 = vmatprep.subr.bf16.mxu0 0
  %1040 = vmatpush1.bf16.msra.mxu0 %v1023
  %1041 = vmatprep.subr.bf16.mxu0 0
  %1042 = vmatpush1.bf16.msra.mxu0 %v1024
  %1043 = vmatprep.subr.bf16.mxu0 0
  %1044 = vmatpush1.bf16.msra.mxu0 %v1025
  %1045 = vmatprep.subr.bf16.mxu0 0
  %1046 = vmatpush1.bf16.msra.mxu0 %v1026
  %1047 = vmatprep.subr.bf16.mxu0 0
  %1048 = vmatpush1.bf16.msra.mxu0 %v1027
  %1049 = vmatprep.subr.bf16.mxu0 0
  %1050 = vmatpush1.bf16.msra.mxu0 %v1028
  %1051 = vmatprep.subr.bf16.mxu0 0
  %1052 = vmatpush1.bf16.msra.mxu0 %v1029
  %1053 = vmatprep.subr.bf16.mxu0 0
  %1054 = vmatpush1.bf16.msra.mxu0 %v1030
  %1055 = vmatprep.subr.bf16.mxu0 0
  %1056 = vmatpush1.bf16.msra.mxu0 0
  %1057 = vmatprep.subr.bf16.mxu0 0
  %1058 = vmatpush1.bf16.msra.mxu0 0
  %1059 = vmatprep.subr.bf16.mxu0 0
  %1060 = vmatpush1.bf16.msra.mxu0 0
  %1061 = vmatprep.subr.bf16.mxu0 0
  %1062 = vmatpush1.bf16.msra.mxu0 0
  %1063 = vmatprep.subr.bf16.mxu0 0
  %1064 = vmatpush1.bf16.msra.mxu0 0
  %1065 = vmatprep.subr.bf16.mxu0 0
  %1066 = vmatpush1.bf16.msra.mxu0 0
  %1067 = vmatprep.subr.bf16.mxu0 0
  %1068 = vmatpush1.bf16.msra.mxu0 0
  %1069 = vmatprep.subr.bf16.mxu0 0
  %1070 = vmatpush1.bf16.msra.mxu0 0
  %1071 = vmatprep.mubr.bf16.mxu0 0
  %1072 = vmatmul.mubr.bf16.gmra.mrb[0].mxu0 %v967
  %v1073 = vpop.f32.mrb[0].mxu0
  %v1074 = vadd.f32 %v989, %v1073
  %v1075 = vpop.f32.mrb[0].mxu0
  %v1076 = vpop.f32.mrb[0].mxu0
  %v1077 = vadd.f32 %v989, %v1076
  %v1078 = vpop.f32.mrb[0].mxu0
  %1079 = vdwg.mxu0
  %v1080 = vtanh.pop %v1074
  %v1081 = vtanh.pop %v1077
  %v1082 = vpack.c.bf16 %v1081, %v1080
  %v1083 = vld [vmem:[%s11] sm:$0xf]
  %v1084 = vld [vmem:[%s11 + $0x4] sm:$0xf]
  %v1085 = vld [vmem:[%s11 + $0x8] sm:$0xf]
  %v1086 = vld [vmem:[%s11 + $0xc] sm:$0xf]
  %v1087 = vld [vmem:[%s11 + $0x10] sm:$0xf]
  %v1088 = vld [vmem:[%s11 + $0x14] sm:$0xf]
  %v1089 = vld [vmem:[%s11 + $0x18] sm:$0xf]
  %v1090 = vld [vmem:[%s11 + $0x1c] sm:$0xf]
  %v1091 = vld [vmem:[%s11 + $0x20] sm:$0xf]
  %v1092 = vld [vmem:[%s11 + $0x24] sm:$0xf]
  %v1093 = vld [vmem:[%s11 + $0x28] sm:$0xf]
  %v1094 = vld [vmem:[%s11 + $0x2c] sm:$0xf]
  %v1095 = vld [vmem:[%s11 + $0x30] sm:$0xf]
  %v1096 = vld [vmem:[%s11 + $0x34] sm:$0xf]
  %v1097 = vld [vmem:[%s11 + $0x38] sm:$0xf]
  %v1098 = vld [vmem:[%s11 + $0x3c] sm:$0xf]
  %v1099 = vld [vmem:[%s12] sm:$0x1]
  %v1101 = vlaneseq
  %v1102 = vshrl.u32 %v1101, 7
  %v1103 = vsub.s32 0, %v1102
  %v1104 = vrot.slane %v1099, %v1103
  %v1122 = vunpack.c.l.b16 %v1083
  %v1123 = vunpack.c.l.b16 %v1084
  %v1124 = vunpack.c.l.b16 %v1085
  %v1125 = vunpack.c.l.b16 %v1086
  %v1126 = vunpack.c.l.b16 %v1087
  %v1127 = vunpack.c.l.b16 %v1088
  %v1128 = vunpack.c.l.b16 %v1089
  %v1129 = vunpack.c.l.b16 %v1090
  %v1130 = vunpack.c.l.b16 %v1091
  %v1131 = vunpack.c.l.b16 %v1092
  %v1132 = vunpack.c.l.b16 %v1093
  %v1133 = vunpack.c.l.b16 %v1094
  %v1134 = vunpack.c.l.b16 %v1095
  %v1135 = vunpack.c.l.b16 %v1096
  %v1136 = vunpack.c.l.b16 %v1097
  %v1137 = vunpack.c.l.b16 %v1098
  %v1138 = vpack.c.b16 %v1123, %v1122
  %v1139 = vpack.c.b16 %v1125, %v1124
  %v1140 = vpack.c.b16 %v1127, %v1126
  %v1141 = vpack.c.b16 %v1129, %v1128
  %v1142 = vpack.c.b16 %v1131, %v1130
  %v1143 = vpack.c.b16 %v1133, %v1132
  %v1144 = vpack.c.b16 %v1135, %v1134
  %v1145 = vpack.c.b16 %v1137, %v1136
  %1154 = vmatprep.subr.bf16.mxu0 0
  %1155 = vmatpush1.bf16.msra.mxu0 %v1138
  %1156 = vmatprep.subr.bf16.mxu0 0
  %1157 = vmatpush1.bf16.msra.mxu0 %v1139
  %1158 = vmatprep.subr.bf16.mxu0 0
  %1159 = vmatpush1.bf16.msra.mxu0 %v1140
  %1160 = vmatprep.subr.bf16.mxu0 0
  %1161 = vmatpush1.bf16.msra.mxu0 %v1141
  %1162 = vmatprep.subr.bf16.mxu0 0
  %1163 = vmatpush1.bf16.msra.mxu0 %v1142
  %1164 = vmatprep.subr.bf16.mxu0 0
  %1165 = vmatpush1.bf16.msra.mxu0 %v1143
  %1166 = vmatprep.subr.bf16.mxu0 0
  %1167 = vmatpush1.bf16.msra.mxu0 %v1144
  %1168 = vmatprep.subr.bf16.mxu0 0
  %1169 = vmatpush1.bf16.msra.mxu0 %v1145
  %1170 = vmatprep.subr.bf16.mxu0 0
  %1171 = vmatpush1.bf16.msra.mxu0 0
  %1172 = vmatprep.subr.bf16.mxu0 0
  %1173 = vmatpush1.bf16.msra.mxu0 0
  %1174 = vmatprep.subr.bf16.mxu0 0
  %1175 = vmatpush1.bf16.msra.mxu0 0
  %1176 = vmatprep.subr.bf16.mxu0 0
  %1177 = vmatpush1.bf16.msra.mxu0 0
  %1178 = vmatprep.subr.bf16.mxu0 0
  %1179 = vmatpush1.bf16.msra.mxu0 0
  %1180 = vmatprep.subr.bf16.mxu0 0
  %1181 = vmatpush1.bf16.msra.mxu0 0
  %1182 = vmatprep.subr.bf16.mxu0 0
  %1183 = vmatpush1.bf16.msra.mxu0 0
  %1184 = vmatprep.subr.bf16.mxu0 0
  %1185 = vmatpush1.bf16.msra.mxu0 0
  %1186 = vmatprep.mubr.bf16.mxu0 0
  %1187 = vmatmul.mubr.bf16.gmra.mrb[0].mxu0 %v1082
  %v1188 = vpop.f32.mrb[0].mxu0
  %v1189 = vadd.f32 %v1104, %v1188
  %v1190 = vpop.f32.mrb[0].mxu0
  %v1191 = vpop.f32.mrb[0].mxu0
  %v1192 = vadd.f32 %v1104, %v1191
  %v1193 = vpop.f32.mrb[0].mxu0
  %1194 = vdwg.mxu0
  %v1195 = vtanh.pop %v1189
  %v1196 = vtanh.pop %v1192
  %v1197 = vpack.c.bf16 %v1196, %v1195
  %v1198 = vld [vmem:[%s13] sm:$0xf]
  %v1199 = vld [vmem:[%s13 + $0x4] sm:$0xf]
  %v1200 = vld [vmem:[%s13 + $0x8] sm:$0xf]
  %v1201 = vld [vmem:[%s13 + $0xc] sm:$0xf]
  %v1202 = vld [vmem:[%s13 + $0x10] sm:$0xf]
  %v1203 = vld [vmem:[%s13 + $0x14] sm:$0xf]
  %v1204 = vld [vmem:[%s13 + $0x18] sm:$0xf]
  %v1205 = vld [vmem:[%s13 + $0x1c] sm:$0xf]
  %v1206 = vld [vmem:[%s14] sm:$0x1]
  %v1208 = vlaneseq
  %v1209 = vshrl.u32 %v1208, 7
  %v1210 = vsub.s32 0, %v1209
  %v1211 = vrot.slane %v1206, %v1210
  %v1221 = vunpack.c.l.b16 %v1198
  %v1222 = vunpack.c.l.b16 %v1199
  %v1223 = vunpack.c.l.b16 %v1200
  %v1224 = vunpack.c.l.b16 %v1201
  %v1225 = vunpack.c.l.b16 %v1202
  %v1226 = vunpack.c.l.b16 %v1203
  %v1227 = vunpack.c.l.b16 %v1204
  %v1228 = vunpack.c.l.b16 %v1205
  %v1229 = vpack.c.b16 %v1222, %v1221
  %v1230 = vpack.c.b16 %v1224, %v1223
  %v1231 = vpack.c.b16 %v1226, %v1225
  %v1232 = vpack.c.b16 %v1228, %v1227
  %v1238 = vsel %vm804, %v1197, 0
  %1240 = vmatprep.subr.bf16.mxu0 0
  %1241 = vmatpush1.bf16.msra.mxu0 %v1229
  %1242 = vmatprep.subr.bf16.mxu0 0
  %1243 = vmatpush1.bf16.msra.mxu0 %v1230
  %1244 = vmatprep.subr.bf16.mxu0 0
  %1245 = vmatpush1.bf16.msra.mxu0 %v1231
  %1246 = vmatprep.subr.bf16.mxu0 0
  %1247 = vmatpush1.bf16.msra.mxu0 %v1232
  %1248 = vmatprep.subr.bf16.mxu0 0
  %1249 = vmatpush1.bf16.msra.mxu0 0
  %1250 = vmatprep.subr.bf16.mxu0 0
  %1251 = vmatpush1.bf16.msra.mxu0 0
  %1252 = vmatprep.subr.bf16.mxu0 0
  %1253 = vmatpush1.bf16.msra.mxu0 0
  %1254 = vmatprep.subr.bf16.mxu0 0
  %1255 = vmatpush1.bf16.msra.mxu0 0
  %1256 = vmatprep.subr.bf16.mxu0 0
  %1257 = vmatpush1.bf16.msra.mxu0 0
  %1258 = vmatprep.subr.bf16.mxu0 0
  %1259 = vmatpush1.bf16.msra.mxu0 0
  %1260 = vmatprep.subr.bf16.mxu0 0
  %1261 = vmatpush1.bf16.msra.mxu0 0
  %1262 = vmatprep.subr.bf16.mxu0 0
  %1263 = vmatpush1.bf16.msra.mxu0 0
  %1264 = vmatprep.subr.bf16.mxu0 0
  %1265 = vmatpush1.bf16.msra.mxu0 0
  %1266 = vmatprep.subr.bf16.mxu0 0
  %1267 = vmatpush1.bf16.msra.mxu0 0
  %1268 = vmatprep.subr.bf16.mxu0 0
  %1269 = vmatpush1.bf16.msra.mxu0 0
  %1270 = vmatprep.subr.bf16.mxu0 0
  %1271 = vmatpush1.bf16.msra.mxu0 0
  %1272 = vmatprep.mubr.bf16.mxu0 0
  %1273 = vmatmul.mubr.bf16.gmra.mrb[0].mxu0 %v1238
  %v1274 = vpop.f32.mrb[0].mxu0
  %v1275 = vadd.f32 %v1211, %v1274
  %v1276 = vpop.f32.mrb[0].mxu0
  %v1277 = vpop.f32.mrb[0].mxu0
  %v1278 = vadd.f32 %v1211, %v1277
  %v1279 = vpop.f32.mrb[0].mxu0
  %1280 = vdwg.mxu0
  %v1281 = vtanh.pop %v1275
  %v1282 = vtanh.pop %v1278
  %v1283 = vpack.c.bf16 %v1282, %v1281
  %v1284 = vld [vmem:[%s15] sm:$0xff]
  %v1285 = vld [vmem:[%s15 + $0x8] sm:$0xff]
  %v1286 = vld [vmem:[%s15 + $0x10] sm:$0xff]
  %v1287 = vld [vmem:[%s15 + $0x18] sm:$0xf]
  %v1288 = vld [vmem:[%s15 + $0x1c] sm:$0xff]
  %v1289 = vld [vmem:[%s15 + $0x24] sm:$0xff]
  %v1290 = vld [vmem:[%s15 + $0x2c] sm:$0xff]
  %v1291 = vld [vmem:[%s15 + $0x34] sm:$0xf]
  %v1292 = vld [vmem:[%s15 + $0x38] sm:$0xff]
  %v1293 = vld [vmem:[%s15 + $0x40] sm:$0xff]
  %v1294 = vld [vmem:[%s15 + $0x48] sm:$0xff]
  %v1295 = vld [vmem:[%s15 + $0x50] sm:$0xf]
  %v1296 = vld [vmem:[%s15 + $0x54] sm:$0xff]
  %v1297 = vld [vmem:[%s15 + $0x5c] sm:$0xff]
  %v1298 = vld [vmem:[%s15 + $0x64] sm:$0xff]
  %v1299 = vld [vmem:[%s15 + $0x6c] sm:$0xf]
  %v1300 = vld [vmem:[%s15 + $0x70] sm:$0xff]
  %v1301 = vld [vmem:[%s15 + $0x78] sm:$0xff]
  %v1302 = vld [vmem:[%s15 + $0x80] sm:$0xff]
  %v1303 = vld [vmem:[%s15 + $0x88] sm:$0xf]
  %v1304 = vld [vmem:[%s15 + $0x8c] sm:$0xff]
  %v1305 = vld [vmem:[%s15 + $0x94] sm:$0xff]
  %v1306 = vld [vmem:[%s15 + $0x9c] sm:$0xff]
  %v1307 = vld [vmem:[%s15 + $0xa4] sm:$0xf]
  %v1308 = vld [vmem:[%s15 + $0xa8] sm:$0xff]
  %v1309 = vld [vmem:[%s15 + $0xb0] sm:$0xff]
  %v1310 = vld [vmem:[%s15 + $0xb8] sm:$0xff]
  %v1311 = vld [vmem:[%s15 + $0xc0] sm:$0xf]
  %v1312 = vld [vmem:[%s15 + $0xc4] sm:$0xff]
  %v1313 = vld [vmem:[%s15 + $0xcc] sm:$0xff]
  %v1314 = vld [vmem:[%s15 + $0xd4] sm:$0xff]
  %v1315 = vld [vmem:[%s15 + $0xdc] sm:$0xf]
  %v1316 = vld [vmem:[%s15 + $0xe0] sm:$0xff]
  %v1317 = vld [vmem:[%s15 + $0xe8] sm:$0xff]
  %v1318 = vld [vmem:[%s15 + $0xf0] sm:$0xff]
  %v1319 = vld [vmem:[%s15 + $0xf8] sm:$0xf]
  %v1320 = vld [vmem:[%s15 + $0xfc] sm:$0xff]
  %v1321 = vld [vmem:[%s15 + $0x104] sm:$0xff]
  %v1322 = vld [vmem:[%s15 + $0x10c] sm:$0xff]
  %v1323 = vld [vmem:[%s15 + $0x114] sm:$0xf]
  %v1324 = vld [vmem:[%s15 + $0x118] sm:$0xff]
  %v1325 = vld [vmem:[%s15 + $0x120] sm:$0xff]
  %v1326 = vld [vmem:[%s15 + $0x128] sm:$0xff]
  %v1327 = vld [vmem:[%s15 + $0x130] sm:$0xf]
  %v1328 = vld [vmem:[%s15 + $0x134] sm:$0xff]
  %v1329 = vld [vmem:[%s15 + $0x13c] sm:$0xff]
  %v1330 = vld [vmem:[%s15 + $0x144] sm:$0xff]
  %v1331 = vld [vmem:[%s15 + $0x14c] sm:$0xf]
  %v1332 = vld [vmem:[%s15 + $0x150] sm:$0xff]
  %v1333 = vld [vmem:[%s15 + $0x158] sm:$0xff]
  %v1334 = vld [vmem:[%s15 + $0x160] sm:$0xff]
  %v1335 = vld [vmem:[%s15 + $0x168] sm:$0xf]
  %v1336 = vld [vmem:[%s15 + $0x16c] sm:$0xff]
  %v1337 = vld [vmem:[%s15 + $0x174] sm:$0xff]
  %v1338 = vld [vmem:[%s15 + $0x17c] sm:$0xff]
  %v1339 = vld [vmem:[%s15 + $0x184] sm:$0xf]
  %v1340 = vld [vmem:[%s15 + $0x188] sm:$0xff]
  %v1341 = vld [vmem:[%s15 + $0x190] sm:$0xff]
  %v1342 = vld [vmem:[%s15 + $0x198] sm:$0xff]
  %v1343 = vld [vmem:[%s15 + $0x1a0] sm:$0xf]
  %v1344 = vld [vmem:[%s15 + $0x1a4] sm:$0xff]
  %v1345 = vld [vmem:[%s15 + $0x1ac] sm:$0xff]
  %v1346 = vld [vmem:[%s15 + $0x1b4] sm:$0xff]
  %v1347 = vld [vmem:[%s15 + $0x1bc] sm:$0xf]
  %v1348 = vld [vmem:[%s16] sm:$0x7f]
  %v1350 = vlaneseq
  %v1351 = vshrl.u32 %v1350, 7
  %v1352 = vsub.s32 0, %v1351
  %v1353 = vrot.slane %v1348, %v1352
  %v1354 = vlaneseq
  %v1355 = vshrl.u32 %v1354, 7
  %v1356 = vsub.s32 1, %v1355
  %v1357 = vrot.slane %v1348, %v1356
  %v1358 = vlaneseq
  %v1359 = vshrl.u32 %v1358, 7
  %v1360 = vsub.s32 2, %v1359
  %v1361 = vrot.slane %v1348, %v1360
  %v1362 = vlaneseq
  %v1363 = vshrl.u32 %v1362, 7
  %v1364 = vsub.s32 3, %v1363
  %v1365 = vrot.slane %v1348, %v1364
  %v1366 = vlaneseq
  %v1367 = vshrl.u32 %v1366, 7
  %v1368 = vsub.s32 4, %v1367
  %v1369 = vrot.slane %v1348, %v1368
  %v1370 = vlaneseq
  %v1371 = vshrl.u32 %v1370, 7
  %v1372 = vsub.s32 5, %v1371
  %v1373 = vrot.slane %v1348, %v1372
  %v1374 = vlaneseq
  %v1375 = vshrl.u32 %v1374, 7
  %v1376 = vsub.s32 6, %v1375
  %v1377 = vrot.slane %v1348, %v1376
  %v1449 = vunpack.c.l.b16 %v1284
  %v1450 = vunpack.c.h.b16 %v1284
  %v1451 = vunpack.c.l.b16 %v1285
  %v1452 = vunpack.c.h.b16 %v1285
  %v1453 = vunpack.c.l.b16 %v1286
  %v1454 = vunpack.c.h.b16 %v1286
  %v1455 = vunpack.c.l.b16 %v1287
  %v1456 = vunpack.c.l.b16 %v1288
  %v1457 = vunpack.c.h.b16 %v1288
  %v1458 = vunpack.c.l.b16 %v1289
  %v1459 = vunpack.c.h.b16 %v1289
  %v1460 = vunpack.c.l.b16 %v1290
  %v1461 = vunpack.c.h.b16 %v1290
  %v1462 = vunpack.c.l.b16 %v1291
  %v1463 = vunpack.c.l.b16 %v1292
  %v1464 = vunpack.c.h.b16 %v1292
  %v1465 = vunpack.c.l.b16 %v1293
  %v1466 = vunpack.c.h.b16 %v1293
  %v1467 = vunpack.c.l.b16 %v1294
  %v1468 = vunpack.c.h.b16 %v1294
  %v1469 = vunpack.c.l.b16 %v1295
  %v1470 = vunpack.c.l.b16 %v1296
  %v1471 = vunpack.c.h.b16 %v1296
  %v1472 = vunpack.c.l.b16 %v1297
  %v1473 = vunpack.c.h.b16 %v1297
  %v1474 = vunpack.c.l.b16 %v1298
  %v1475 = vunpack.c.h.b16 %v1298
  %v1476 = vunpack.c.l.b16 %v1299
  %v1477 = vunpack.c.l.b16 %v1300
  %v1478 = vunpack.c.h.b16 %v1300
  %v1479 = vunpack.c.l.b16 %v1301
  %v1480 = vunpack.c.h.b16 %v1301
  %v1481 = vunpack.c.l.b16 %v1302
  %v1482 = vunpack.c.h.b16 %v1302
  %v1483 = vunpack.c.l.b16 %v1303
  %v1484 = vunpack.c.l.b16 %v1304
  %v1485 = vunpack.c.h.b16 %v1304
  %v1486 = vunpack.c.l.b16 %v1305
  %v1487 = vunpack.c.h.b16 %v1305
  %v1488 = vunpack.c.l.b16 %v1306
  %v1489 = vunpack.c.h.b16 %v1306
  %v1490 = vunpack.c.l.b16 %v1307
  %v1491 = vunpack.c.l.b16 %v1308
  %v1492 = vunpack.c.h.b16 %v1308
  %v1493 = vunpack.c.l.b16 %v1309
  %v1494 = vunpack.c.h.b16 %v1309
  %v1495 = vunpack.c.l.b16 %v1310
  %v1496 = vunpack.c.h.b16 %v1310
  %v1497 = vunpack.c.l.b16 %v1311
  %v1498 = vunpack.c.l.b16 %v1312
  %v1499 = vunpack.c.h.b16 %v1312
  %v1500 = vunpack.c.l.b16 %v1313
  %v1501 = vunpack.c.h.b16 %v1313
  %v1502 = vunpack.c.l.b16 %v1314
  %v1503 = vunpack.c.h.b16 %v1314
  %v1504 = vunpack.c.l.b16 %v1315
  %v1505 = vunpack.c.l.b16 %v1316
  %v1506 = vunpack.c.h.b16 %v1316
  %v1507 = vunpack.c.l.b16 %v1317
  %v1508 = vunpack.c.h.b16 %v1317
  %v1509 = vunpack.c.l.b16 %v1318
  %v1510 = vunpack.c.h.b16 %v1318
  %v1511 = vunpack.c.l.b16 %v1319
  %v1512 = vunpack.c.l.b16 %v1320
  %v1513 = vunpack.c.h.b16 %v1320
  %v1514 = vunpack.c.l.b16 %v1321
  %v1515 = vunpack.c.h.b16 %v1321
  %v1516 = vunpack.c.l.b16 %v1322
  %v1517 = vunpack.c.h.b16 %v1322
  %v1518 = vunpack.c.l.b16 %v1323
  %v1519 = vunpack.c.l.b16 %v1324
  %v1520 = vunpack.c.h.b16 %v1324
  %v1521 = vunpack.c.l.b16 %v1325
  %v1522 = vunpack.c.h.b16 %v1325
  %v1523 = vunpack.c.l.b16 %v1326
  %v1524 = vunpack.c.h.b16 %v1326
  %v1525 = vunpack.c.l.b16 %v1327
  %v1526 = vunpack.c.l.b16 %v1328
  %v1527 = vunpack.c.h.b16 %v1328
  %v1528 = vunpack.c.l.b16 %v1329
  %v1529 = vunpack.c.h.b16 %v1329
  %v1530 = vunpack.c.l.b16 %v1330
  %v1531 = vunpack.c.h.b16 %v1330
  %v1532 = vunpack.c.l.b16 %v1331
  %v1533 = vunpack.c.l.b16 %v1332
  %v1534 = vunpack.c.h.b16 %v1332
  %v1535 = vunpack.c.l.b16 %v1333
  %v1536 = vunpack.c.h.b16 %v1333
  %v1537 = vunpack.c.l.b16 %v1334
  %v1538 = vunpack.c.h.b16 %v1334
  %v1539 = vunpack.c.l.b16 %v1335
  %v1540 = vunpack.c.l.b16 %v1336
  %v1541 = vunpack.c.h.b16 %v1336
  %v1542 = vunpack.c.l.b16 %v1337
  %v1543 = vunpack.c.h.b16 %v1337
  %v1544 = vunpack.c.l.b16 %v1338
  %v1545 = vunpack.c.h.b16 %v1338
  %v1546 = vunpack.c.l.b16 %v1339
  %v1547 = vunpack.c.l.b16 %v1340
  %v1548 = vunpack.c.h.b16 %v1340
  %v1549 = vunpack.c.l.b16 %v1341
  %v1550 = vunpack.c.h.b16 %v1341
  %v1551 = vunpack.c.l.b16 %v1342
  %v1552 = vunpack.c.h.b16 %v1342
  %v1553 = vunpack.c.l.b16 %v1343
  %v1554 = vunpack.c.l.b16 %v1344
  %v1555 = vunpack.c.h.b16 %v1344
  %v1556 = vunpack.c.l.b16 %v1345
  %v1557 = vunpack.c.h.b16 %v1345
  %v1558 = vunpack.c.l.b16 %v1346
  %v1559 = vunpack.c.h.b16 %v1346
  %v1560 = vunpack.c.l.b16 %v1347
  %v1561 = vpack.c.b16 %v1456, %v1449
  %v1562 = vpack.c.b16 %v1457, %v1450
  %v1563 = vpack.c.b16 %v1458, %v1451
  %v1564 = vpack.c.b16 %v1459, %v1452
  %v1565 = vpack.c.b16 %v1460, %v1453
  %v1566 = vpack.c.b16 %v1461, %v1454
  %v1567 = vpack.c.b16 %v1462, %v1455
  %v1568 = vpack.c.b16 %v1470, %v1463
  %v1569 = vpack.c.b16 %v1471, %v1464
  %v1570 = vpack.c.b16 %v1472, %v1465
  %v1571 = vpack.c.b16 %v1473, %v1466
  %v1572 = vpack.c.b16 %v1474, %v1467
  %v1573 = vpack.c.b16 %v1475, %v1468
  %v1574 = vpack.c.b16 %v1476, %v1469
  %v1575 = vpack.c.b16 %v1484, %v1477
  %v1576 = vpack.c.b16 %v1485, %v1478
  %v1577 = vpack.c.b16 %v1486, %v1479
  %v1578 = vpack.c.b16 %v1487, %v1480
  %v1579 = vpack.c.b16 %v1488, %v1481
  %v1580 = vpack.c.b16 %v1489, %v1482
  %v1581 = vpack.c.b16 %v1490, %v1483
  %v1582 = vpack.c.b16 %v1498, %v1491
  %v1583 = vpack.c.b16 %v1499, %v1492
  %v1584 = vpack.c.b16 %v1500, %v1493
  %v1585 = vpack.c.b16 %v1501, %v1494
  %v1586 = vpack.c.b16 %v1502, %v1495
  %v1587 = vpack.c.b16 %v1503, %v1496
  %v1588 = vpack.c.b16 %v1504, %v1497
  %v1589 = vpack.c.b16 %v1512, %v1505
  %v1590 = vpack.c.b16 %v1513, %v1506
  %v1591 = vpack.c.b16 %v1514, %v1507
  %v1592 = vpack.c.b16 %v1515, %v1508
  %v1593 = vpack.c.b16 %v1516, %v1509
  %v1594 = vpack.c.b16 %v1517, %v1510
  %v1595 = vpack.c.b16 %v1518, %v1511
  %v1596 = vpack.c.b16 %v1526, %v1519
  %v1597 = vpack.c.b16 %v1527, %v1520
  %v1598 = vpack.c.b16 %v1528, %v1521
  %v1599 = vpack.c.b16 %v1529, %v1522
  %v1600 = vpack.c.b16 %v1530, %v1523
  %v1601 = vpack.c.b16 %v1531, %v1524
  %v1602 = vpack.c.b16 %v1532, %v1525
  %v1603 = vpack.c.b16 %v1540, %v1533
  %v1604 = vpack.c.b16 %v1541, %v1534
  %v1605 = vpack.c.b16 %v1542, %v1535
  %v1606 = vpack.c.b16 %v1543, %v1536
  %v1607 = vpack.c.b16 %v1544, %v1537
  %v1608 = vpack.c.b16 %v1545, %v1538
  %v1609 = vpack.c.b16 %v1546, %v1539
  %v1610 = vpack.c.b16 %v1554, %v1547
  %v1611 = vpack.c.b16 %v1555, %v1548
  %v1612 = vpack.c.b16 %v1556, %v1549
  %v1613 = vpack.c.b16 %v1557, %v1550
  %v1614 = vpack.c.b16 %v1558, %v1551
  %v1615 = vpack.c.b16 %v1559, %v1552
  %v1616 = vpack.c.b16 %v1560, %v1553
  %1673 = vmatprep.subr.bf16.mxu0 %v1562
  %1674 = vmatpush1.bf16.msra.mxu0 %v1561
  %1675 = vmatprep.subr.bf16.mxu0 %v1569
  %1676 = vmatpush1.bf16.msra.mxu0 %v1568
  %1677 = vmatprep.subr.bf16.mxu0 %v1576
  %1678 = vmatpush1.bf16.msra.mxu0 %v1575
  %1679 = vmatprep.subr.bf16.mxu0 %v1583
  %1680 = vmatpush1.bf16.msra.mxu0 %v1582
  %1681 = vmatprep.subr.bf16.mxu0 %v1590
  %1682 = vmatpush1.bf16.msra.mxu0 %v1589
  %1683 = vmatprep.subr.bf16.mxu0 %v1597
  %1684 = vmatpush1.bf16.msra.mxu0 %v1596
  %1685 = vmatprep.subr.bf16.mxu0 %v1604
  %1686 = vmatpush1.bf16.msra.mxu0 %v1603
  %1687 = vmatprep.subr.bf16.mxu0 %v1611
  %1688 = vmatpush1.bf16.msra.mxu0 %v1610
  %1689 = vmatprep.subr.bf16.mxu0 0
  %1690 = vmatpush1.bf16.msra.mxu0 0
  %1691 = vmatprep.subr.bf16.mxu0 0
  %1692 = vmatpush1.bf16.msra.mxu0 0
  %1693 = vmatprep.subr.bf16.mxu0 0
  %1694 = vmatpush1.bf16.msra.mxu0 0
  %1695 = vmatprep.subr.bf16.mxu0 0
  %1696 = vmatpush1.bf16.msra.mxu0 0
  %1697 = vmatprep.subr.bf16.mxu0 0
  %1698 = vmatpush1.bf16.msra.mxu0 0
  %1699 = vmatprep.subr.bf16.mxu0 0
  %1700 = vmatpush1.bf16.msra.mxu0 0
  %1701 = vmatprep.subr.bf16.mxu0 0
  %1702 = vmatpush1.bf16.msra.mxu0 0
  %1703 = vmatprep.subr.bf16.mxu0 0
  %1704 = vmatpush1.bf16.msra.mxu0 0
  %1705 = vmatprep.mubr.bf16.mxu0 0
  %1706 = vmatmul.mubr.bf16.gmra.mrb[0].mxu0 %v1283
  %v1707 = vpop.f32.mrb[0].mxu0
  %v1708 = vadd.f32 %v1353, %v1707
  %v1709 = vpop.f32.mrb[0].mxu0
  %v1710 = vadd.f32 %v1357, %v1709
  %v1711 = vpop.f32.mrb[0].mxu0
  %v1712 = vadd.f32 %v1353, %v1711
  %v1713 = vpop.f32.mrb[0].mxu0
  %v1714 = vadd.f32 %v1357, %v1713
  %1715 = vdwg.mxu0
  %1716 = vmatprep.subr.bf16.mxu0 %v1564
  %1717 = vmatpush1.bf16.msra.mxu0 %v1563
  %1718 = vmatprep.subr.bf16.mxu0 %v1571
  %1719 = vmatpush1.bf16.msra.mxu0 %v1570
  %1720 = vmatprep.subr.bf16.mxu0 %v1578
  %1721 = vmatpush1.bf16.msra.mxu0 %v1577
  %1722 = vmatprep.subr.bf16.mxu0 %v1585
  %1723 = vmatpush1.bf16.msra.mxu0 %v1584
  %1724 = vmatprep.subr.bf16.mxu0 %v1592
  %1725 = vmatpush1.bf16.msra.mxu0 %v1591
  %1726 = vmatprep.subr.bf16.mxu0 %v1599
  %1727 = vmatpush1.bf16.msra.mxu0 %v1598
  %1728 = vmatprep.subr.bf16.mxu0 %v1606
  %1729 = vmatpush1.bf16.msra.mxu0 %v1605
  %1730 = vmatprep.subr.bf16.mxu0 %v1613
  %1731 = vmatpush1.bf16.msra.mxu0 %v1612
  %1732 = vmatprep.subr.bf16.mxu0 0
  %1733 = vmatpush1.bf16.msra.mxu0 0
  %1734 = vmatprep.subr.bf16.mxu0 0
  %1735 = vmatpush1.bf16.msra.mxu0 0
  %1736 = vmatprep.subr.bf16.mxu0 0
  %1737 = vmatpush1.bf16.msra.mxu0 0
  %1738 = vmatprep.subr.bf16.mxu0 0
  %1739 = vmatpush1.bf16.msra.mxu0 0
  %1740 = vmatprep.subr.bf16.mxu0 0
  %1741 = vmatpush1.bf16.msra.mxu0 0
  %1742 = vmatprep.subr.bf16.mxu0 0
  %1743 = vmatpush1.bf16.msra.mxu0 0
  %1744 = vmatprep.subr.bf16.mxu0 0
  %1745 = vmatpush1.bf16.msra.mxu0 0
  %1746 = vmatprep.subr.bf16.mxu0 0
  %1747 = vmatpush1.bf16.msra.mxu0 0
  %1748 = vmatprep.mubr.bf16.mxu0 0
  %1749 = vmatmul.mubr.bf16.gmra.mrb[0].mxu0 %v1283
  %v1750 = vpop.f32.mrb[0].mxu0
  %v1751 = vadd.f32 %v1361, %v1750
  %v1752 = vpop.f32.mrb[0].mxu0
  %v1753 = vadd.f32 %v1365, %v1752
  %v1754 = vpop.f32.mrb[0].mxu0
  %v1755 = vadd.f32 %v1361, %v1754
  %v1756 = vpop.f32.mrb[0].mxu0
  %v1757 = vadd.f32 %v1365, %v1756
  %1758 = vdwg.mxu0
  %1759 = vmatprep.subr.bf16.mxu0 %v1566
  %1760 = vmatpush1.bf16.msra.mxu0 %v1565
  %1761 = vmatprep.subr.bf16.mxu0 %v1573
  %1762 = vmatpush1.bf16.msra.mxu0 %v1572
  %1763 = vmatprep.subr.bf16.mxu0 %v1580
  %1764 = vmatpush1.bf16.msra.mxu0 %v1579
  %1765 = vmatprep.subr.bf16.mxu0 %v1587
  %1766 = vmatpush1.bf16.msra.mxu0 %v1586
  %1767 = vmatprep.subr.bf16.mxu0 %v1594
  %1768 = vmatpush1.bf16.msra.mxu0 %v1593
  %1769 = vmatprep.subr.bf16.mxu0 %v1601
  %1770 = vmatpush1.bf16.msra.mxu0 %v1600
  %1771 = vmatprep.subr.bf16.mxu0 %v1608
  %1772 = vmatpush1.bf16.msra.mxu0 %v1607
  %1773 = vmatprep.subr.bf16.mxu0 %v1615
  %1774 = vmatpush1.bf16.msra.mxu0 %v1614
  %1775 = vmatprep.subr.bf16.mxu0 0
  %1776 = vmatpush1.bf16.msra.mxu0 0
  %1777 = vmatprep.subr.bf16.mxu0 0
  %1778 = vmatpush1.bf16.msra.mxu0 0
  %1779 = vmatprep.subr.bf16.mxu0 0
  %1780 = vmatpush1.bf16.msra.mxu0 0
  %1781 = vmatprep.subr.bf16.mxu0 0
  %1782 = vmatpush1.bf16.msra.mxu0 0
  %1783 = vmatprep.subr.bf16.mxu0 0
  %1784 = vmatpush1.bf16.msra.mxu0 0
  %1785 = vmatprep.subr.bf16.mxu0 0
  %1786 = vmatpush1.bf16.msra.mxu0 0
  %1787 = vmatprep.subr.bf16.mxu0 0
  %1788 = vmatpush1.bf16.msra.mxu0 0
  %1789 = vmatprep.subr.bf16.mxu0 0
  %1790 = vmatpush1.bf16.msra.mxu0 0
  %1791 = vmatprep.mubr.bf16.mxu0 0
  %1792 = vmatmul.mubr.bf16.gmra.mrb[0].mxu0 %v1283
  %v1793 = vpop.f32.mrb[0].mxu0
  %v1794 = vadd.f32 %v1369, %v1793
  %v1795 = vpop.f32.mrb[0].mxu0
  %v1796 = vadd.f32 %v1373, %v1795
  %v1797 = vpop.f32.mrb[0].mxu0
  %v1798 = vadd.f32 %v1369, %v1797
  %v1799 = vpop.f32.mrb[0].mxu0
  %v1800 = vadd.f32 %v1373, %v1799
  %1801 = vdwg.mxu0
  %1802 = vmatprep.subr.bf16.mxu0 0
  %1803 = vmatpush1.bf16.msra.mxu0 %v1567
  %1804 = vmatprep.subr.bf16.mxu0 0
  %1805 = vmatpush1.bf16.msra.mxu0 %v1574
  %1806 = vmatprep.subr.bf16.mxu0 0
  %1807 = vmatpush1.bf16.msra.mxu0 %v1581
  %1808 = vmatprep.subr.bf16.mxu0 0
  %1809 = vmatpush1.bf16.msra.mxu0 %v1588
  %1810 = vmatprep.subr.bf16.mxu0 0
  %1811 = vmatpush1.bf16.msra.mxu0 %v1595
  %1812 = vmatprep.subr.bf16.mxu0 0
  %1813 = vmatpush1.bf16.msra.mxu0 %v1602
  %1814 = vmatprep.subr.bf16.mxu0 0
  %1815 = vmatpush1.bf16.msra.mxu0 %v1609
  %1816 = vmatprep.subr.bf16.mxu0 0
  %1817 = vmatpush1.bf16.msra.mxu0 %v1616
  %1818 = vmatprep.subr.bf16.mxu0 0
  %1819 = vmatpush1.bf16.msra.mxu0 0
  %1820 = vmatprep.subr.bf16.mxu0 0
  %1821 = vmatpush1.bf16.msra.mxu0 0
  %1822 = vmatprep.subr.bf16.mxu0 0
  %1823 = vmatpush1.bf16.msra.mxu0 0
  %1824 = vmatprep.subr.bf16.mxu0 0
  %1825 = vmatpush1.bf16.msra.mxu0 0
  %1826 = vmatprep.subr.bf16.mxu0 0
  %1827 = vmatpush1.bf16.msra.mxu0 0
  %1828 = vmatprep.subr.bf16.mxu0 0
  %1829 = vmatpush1.bf16.msra.mxu0 0
  %1830 = vmatprep.subr.bf16.mxu0 0
  %1831 = vmatpush1.bf16.msra.mxu0 0
  %1832 = vmatprep.subr.bf16.mxu0 0
  %1833 = vmatpush1.bf16.msra.mxu0 0
  %1834 = vmatprep.mubr.bf16.mxu0 0
  %1835 = vmatmul.mubr.bf16.gmra.mrb[0].mxu0 %v1283
  %v1836 = vpop.f32.mrb[0].mxu0
  %v1837 = vadd.f32 %v1377, %v1836
  %v1838 = vpop.f32.mrb[0].mxu0
  %v1839 = vpop.f32.mrb[0].mxu0
  %v1840 = vadd.f32 %v1377, %v1839
  %v1841 = vpop.f32.mrb[0].mxu0
  %1842 = vdwg.mxu0
  %v1843 = vxor.u32 %v1708, 2147483648
  %v1844 = vxor.u32 %v1710, 2147483648
  %v1845 = vxor.u32 %v1751, 2147483648
  %v1846 = vxor.u32 %v1753, 2147483648
  %v1847 = vxor.u32 %v1794, 2147483648
  %v1848 = vxor.u32 %v1796, 2147483648
  %v1849 = vxor.u32 %v1837, 2147483648
  %v1850 = vxor.u32 %v1712, 2147483648
  %v1851 = vxor.u32 %v1714, 2147483648
  %v1852 = vxor.u32 %v1755, 2147483648
  %v1853 = vxor.u32 %v1757, 2147483648
  %v1854 = vxor.u32 %v1798, 2147483648
  %v1855 = vxor.u32 %v1800, 2147483648
  %v1856 = vxor.u32 %v1840, 2147483648
  %v1857 = vmul.f32 %v1843, 1.442695
  %v1858 = vpow.pop %v1857
  %v1859 = vmul.f32 %v1844, 1.442695
  %v1860 = vpow.pop %v1859
  %v1861 = vmul.f32 %v1845, 1.442695
  %v1862 = vpow.pop %v1861
  %v1863 = vmul.f32 %v1846, 1.442695
  %v1864 = vpow.pop %v1863
  %v1865 = vmul.f32 %v1847, 1.442695
  %v1866 = vpow.pop %v1865
  %v1867 = vmul.f32 %v1848, 1.442695
  %v1868 = vpow.pop %v1867
  %v1869 = vmul.f32 %v1849, 1.442695
  %v1870 = vpow.pop %v1869
  %v1871 = vmul.f32 %v1850, 1.442695
  %v1872 = vpow.pop %v1871
  %v1873 = vmul.f32 %v1851, 1.442695
  %v1874 = vpow.pop %v1873
  %v1875 = vmul.f32 %v1852, 1.442695
  %v1876 = vpow.pop %v1875
  %v1877 = vmul.f32 %v1853, 1.442695
  %v1878 = vpow.pop %v1877
  %v1879 = vmul.f32 %v1854, 1.442695
  %v1880 = vpow.pop %v1879
  %v1881 = vmul.f32 %v1855, 1.442695
  %v1882 = vpow.pop %v1881
  %v1883 = vmul.f32 %v1856, 1.442695
  %v1884 = vpow.pop %v1883
  %v1885 = vadd.f32 %v1858, 1.0
  %v1886 = vadd.f32 %v1860, 1.0
  %v1887 = vadd.f32 %v1862, 1.0
  %v1888 = vadd.f32 %v1864, 1.0
  %v1889 = vadd.f32 %v1866, 1.0
  %v1890 = vadd.f32 %v1868, 1.0
  %v1891 = vadd.f32 %v1870, 1.0
  %v1892 = vadd.f32 %v1872, 1.0
  %v1893 = vadd.f32 %v1874, 1.0
  %v1894 = vadd.f32 %v1876, 1.0
  %v1895 = vadd.f32 %v1878, 1.0
  %v1896 = vadd.f32 %v1880, 1.0
  %v1897 = vadd.f32 %v1882, 1.0
  %v1898 = vadd.f32 %v1884, 1.0
  %v1899 = vrcp.pop %v1885
  %v1900 = vmul.f32 1.0, %v1899
  %v1901 = vrcp.pop %v1886
  %v1902 = vmul.f32 1.0, %v1901
  %v1903 = vrcp.pop %v1887
  %v1904 = vmul.f32 1.0, %v1903
  %v1905 = vrcp.pop %v1888
  %v1906 = vmul.f32 1.0, %v1905
  %v1907 = vrcp.pop %v1889
  %v1908 = vmul.f32 1.0, %v1907
  %v1909 = vrcp.pop %v1890
  %v1910 = vmul.f32 1.0, %v1909
  %v1911 = vrcp.pop %v1891
  %v1912 = vmul.f32 1.0, %v1911
  %v1913 = vrcp.pop %v1892
  %v1914 = vmul.f32 1.0, %v1913
  %v1915 = vrcp.pop %v1893
  %v1916 = vmul.f32 1.0, %v1915
  %v1917 = vrcp.pop %v1894
  %v1918 = vmul.f32 1.0, %v1917
  %v1919 = vrcp.pop %v1895
  %v1920 = vmul.f32 1.0, %v1919
  %v1921 = vrcp.pop %v1896
  %v1922 = vmul.f32 1.0, %v1921
  %v1923 = vrcp.pop %v1897
  %v1924 = vmul.f32 1.0, %v1923
  %v1925 = vrcp.pop %v1898
  %v1926 = vmul.f32 1.0, %v1925
  %v1927 = vpack.c.bf16 %v1914, %v1900
  %v1928 = vpack.c.bf16 %v1916, %v1902
  %v1929 = vpack.c.bf16 %v1918, %v1904
  %v1930 = vpack.c.bf16 %v1920, %v1906
  %v1931 = vpack.c.bf16 %v1922, %v1908
  %v1932 = vpack.c.bf16 %v1924, %v1910
  %v1933 = vpack.c.bf16 %v1926, %v1912
  %v1941 = vunpack.c.l.b16 %v1927
  %v1942 = vunpack.c.l.b16 %v1928
  %v1943 = vunpack.c.l.b16 %v1929
  %v1944 = vunpack.c.l.b16 %v1930
  %v1945 = vunpack.c.l.b16 %v1931
  %v1946 = vunpack.c.l.b16 %v1932
  %v1947 = vunpack.c.l.b16 %v1933
  %v1948 = vunpack.c.h.b16 %v1927
  %v1949 = vunpack.c.h.b16 %v1928
  %v1950 = vunpack.c.h.b16 %v1929
  %v1951 = vunpack.c.h.b16 %v1930
  %v1952 = vunpack.c.h.b16 %v1931
  %v1953 = vunpack.c.h.b16 %v1932
  %v1954 = vunpack.c.h.b16 %v1933
  %v1955 = vpack.c.b16 %v1942, %v1941
  %v1956 = vpack.c.b16 %v1944, %v1943
  %v1957 = vpack.c.b16 %v1946, %v1945
  %v1958 = vpack.c.b16 %v1947, %v1947
  %v1959 = vpack.c.b16 %v1949, %v1948
  %v1960 = vpack.c.b16 %v1951, %v1950
  %v1961 = vpack.c.b16 %v1953, %v1952
  %v1962 = vpack.c.b16 %v1954, %v1954
  %1971 = vst [vmem:[%s18] sm:$0xff] %v1955
  %1972 = vst [vmem:[%s18 + $0x8] sm:$0xff] %v1956
  %1973 = vst [vmem:[%s18 + $0x10] sm:$0xff] %v1957
  %vm1974 = vcmask 125952
  %1975 = vst.msk [vmem:[%s18 + $0x18] sm:$0xf] %vm1974, %v1958
  %1976 = vst [vmem:[%s18 + $0x1c] sm:$0xff] %v1959
  %1977 = vst [vmem:[%s18 + $0x24] sm:$0xff] %v1960
  %1978 = vst [vmem:[%s18 + $0x2c] sm:$0xff] %v1961
  %1979 = vst.msk [vmem:[%s18 + $0x34] sm:$0xf] %vm1974, %v1962
  // Predicated region
  $region70: #{autoencoder_forward.1} parent=0 // pred_check
    _
  $region71: #{autoencoder_forward.1} parent=0 // pred_check_branch
    %1981 = sbr.rel (0) target = $region73
  $region72: #{autoencoder_forward.1} parent=0 // pred_region
    _
  $region73: #{autoencoder_forward.1} parent=0 // pred_fallthru
    _
  // Predicated region
  $region74: #{autoencoder_forward.1} parent=0 // pred_check
    _
  $region75: #{autoencoder_forward.1} parent=0 // pred_check_branch
    %1983 = sbr.rel (0) target = $region77
  $region76: #{autoencoder_forward.1} parent=0 // pred_region
    _
  $region77: #{autoencoder_forward.1} parent=0 // pred_fallthru
    _
  // Predicated region
  $region78: #{autoencoder_forward.1} parent=0 // pred_check
    _
  $region79: #{autoencoder_forward.1} parent=0 // pred_check_branch
    %1985 = sbr.rel (0) target = $region81
  $region80: #{autoencoder_forward.1} parent=0 // pred_region
    _
  $region81: #{autoencoder_forward.1} parent=0 // pred_fallthru
    _
  // Predicated region
  $region82: #{autoencoder_forward.1} parent=0 // pred_check
    _
  $region83: #{autoencoder_forward.1} parent=0 // pred_check_branch
    %1987 = sbr.rel (0) target = $region85
  $region84: #{autoencoder_forward.1} parent=0 // pred_region
    _
  $region85: #{autoencoder_forward.1} parent=0 // pred_fallthru
    _

</llo_original>
